<compile_context>
chip_gen: v6e
topology: v6e:2x2x1
jax: 0.10.0
libtpu: 0.0.40
codegen_flags: <defaults>
</compile_context>

<pallas_src>
import functools

import numpy as np

import jax
import jax.numpy as jnp
from jax.experimental import pallas as pl
from jax.experimental.pallas import tpu as pltpu


def padding(kernel_size, dilation):
    """Mirror of the PyTorch helper in the original module."""
    width_pad_size = kernel_size + (kernel_size - 1) * (dilation - 1)
    return width_pad_size // 2 + (width_pad_size % 2 - 1)


def _dsconv_kernel(x_ref, wf_ref, mask_ref, o_ref, *, K, pad, W):
    # x_ref   : (Bblk, Cin, H*W)   lane-dense flattened input slab (NCHW with HW merged)
    # wf_ref  : (K*K, Cout, Cin)   fused depthwise*pointwise weights, one (Cout,Cin) per tap
    # mask_ref: (K*K, 1, H*W)      1.0 where tap (kh,kw) stays inside the image, else 0.0
    # o_ref   : (Bblk, Cout, H*W)  lane-dense output slab
    Bblk, Cin, HW = x_ref.shape
    KK, Cout, _ = wf_ref.shape

    x = x_ref[...]
    mask = mask_ref[...]
    # Hoisted (tiny) broadcast of the fused weights to the batched-matmul layout.
    wf_b = jnp.broadcast_to(wf_ref[...][:, None, :, :], (KK, Bblk, Cout, Cin))

    acc = jnp.zeros((Bblk, Cout, HW), jnp.float32)
    for kh in range(K):
        for kw in range(K):
            t = kh * K + kw
            off = (kh - pad) * W + (kw - pad)
            # Roll the lane axis so lane n holds x[..., h+dh, w+dw]; the mask zeroes lanes
            # whose (h+dh, w+dw) fell outside the image (implicit zero padding / wrap).
            shifted = x if off == 0 else pltpu.roll(x, shift=(-off) % HW, axis=2)
            tap = shifted * mask[t]                                  # (Bblk, Cin, HW)
            acc = acc + jnp.einsum('boc,bcn->bon', wf_b[t], tap,
                                   preferred_element_type=jnp.float32)
    o_ref[...] = acc.astype(o_ref.dtype)


def depthwise_separable_conv(x_nchw, w_dw, w_pw, *, kernel_size=3, pad=1):
    """x_nchw: (B, Cin, H, W); w_dw: (Cin, 1, K, K); w_pw: (Cout, Cin, 1, 1). dilation=1."""
    B, Cin, H, W = x_nchw.shape
    Cout = w_pw.shape[0]
    K = kernel_size
    HW = H * W
    itemsize = jnp.dtype(x_nchw.dtype).itemsize

    # Fuse depthwise and pointwise weights in f32 (exact for this linear chain, single rounding):
    #   wf[kh*K + kw, o, c] = w_dw[c, 0, kh, kw] * w_pw[o, c, 0, 0]
    wf = jnp.einsum('ckl,oc->kloc',
                    w_dw[:, 0, :, :].astype(jnp.float32),
                    w_pw[:, :, 0, 0].astype(jnp.float32))
    wf = wf.reshape(K * K, Cout, Cin).astype(x_nchw.dtype)

    # Per-tap validity mask over the flattened H*W lane axis (static; built host-side once,
    # so the kernel needs no integer iota / div / mod on the VPU).
    rows = np.arange(HW) // W
    cols = np.arange(HW) % W
    mask_np = np.zeros((K * K, 1, HW), np.float32)
    for kh in range(K):
        for kw in range(K):
            dh, dw = kh - pad, kw - pad
            mask_np[kh * K + kw, 0] = (
                (rows + dh >= 0) & (rows + dh < H) &
                (cols + dw >= 0) & (cols + dw < W)).astype(np.float32)
    mask = jnp.asarray(mask_np, dtype=x_nchw.dtype)

    # Generation-aware VMEM capacity (v7x: 64 MiB/core, v5e/v6e: 128 MiB).
    try:
        vmem_cap = int(pltpu.get_tpu_info().vmem_capacity_bytes)
    except Exception:
        vmem_cap = 64 * 1024 * 1024

    # Fold several batch images per grid step to amortise per-step overhead when Cout / H*W
    # are small: largest divisor of B whose double-buffered blocks fit ~1/8 of VMEM.
    budget = vmem_cap // 8
    bblk = 1
    for cand in range(1, B + 1):
        if B % cand:
            continue
        per_step = (2 * cand * (Cin + Cout) * HW * itemsize   # double-buffered in/out blocks
                    + cand * Cout * HW * 4)                   # f32 accumulator
        if per_step <= budget:
            bblk = cand

    # Lane-dense flattened view (free contiguous reshape, mirrors the output side).
    x_flat = x_nchw.reshape(B, Cin, HW)

    kernel = functools.partial(_dsconv_kernel, K=K, pad=pad, W=W)

    needed = (2 * bblk * (Cin + Cout) * HW * itemsize
              + 2 * bblk * Cout * HW * 4
              + K * K * (Cout * Cin + HW) * itemsize
              + (2 << 20))
    vmem_limit = int(min(max(needed, 16 * 1024 * 1024), 0.75 * vmem_cap))

    # TODO(synk): for very large images (e.g. 224x224x64 on v7x's 64 MiB VMEM) add a second
    # "parallel" grid axis tiling H with a (K-1)//2-row halo (Element-indexed or manual-DMA
    # blocks) so row blocks fit VMEM and feed both v7x TensorCores even at B=1.
    out_flat = pl.pallas_call(
        kernel,
        out_shape=jax.ShapeDtypeStruct((B, Cout, HW), x_nchw.dtype),
        grid_spec=pltpu.PrefetchScalarGridSpec(
            num_scalar_prefetch=0,
            grid=(B // bblk,),
            in_specs=[
                pl.BlockSpec((bblk, Cin, HW), lambda i: (i, 0, 0)),
                # Constant index maps: fused weights and mask are DMA'd once and stay resident.
                pl.BlockSpec((K * K, Cout, Cin), lambda i: (0, 0, 0)),
                pl.BlockSpec((K * K, 1, HW), lambda i: (0, 0, 0)),
            ],
            out_specs=pl.BlockSpec((bblk, Cout, HW), lambda i: (i, 0, 0)),
        ),
        compiler_params=pltpu.CompilerParams(
            dimension_semantics=("parallel",),
            vmem_limit_bytes=vmem_limit),
    )(x_flat, wf, mask)

    # Free (contiguous) reshape back to the PyTorch NCHW output convention.
    return out_flat.reshape(B, Cout, H, W)


def _reference(x_nchw, w_dw, w_pw, *, pad=1):
    # Pure-JAX two-stage reference (lax conv) for the correctness check.
    dw = jax.lax.conv_general_dilated(
        x_nchw, w_dw, window_strides=(1, 1), padding=[(pad, pad), (pad, pad)],
        dimension_numbers=("NCHW", "OIHW", "NCHW"),
        feature_group_count=x_nchw.shape[1])
    return jax.lax.conv_general_dilated(
        dw, w_pw, window_strides=(1, 1), padding="VALID",
        dimension_numbers=("NCHW", "OIHW", "NCHW"))


if __name__ == "__main__":
    B, Cin, Cout, H, W, K = 2, 4, 8, 16, 16, 3
    pad = padding(K, 1)   # = 1, matching the module's default

    key = jax.random.PRNGKey(0)
    kx, kd, kp = jax.random.split(key, 3)
    x = jax.random.normal(kx, (B, Cin, H, W), dtype=jnp.float32)
    # PyTorch weight shapes: depthwise (nin, 1, K, K); pointwise (nout, nin, 1, 1).
    w_dw = jax.random.normal(kd, (Cin, 1, K, K), dtype=jnp.float32) * 0.1
    w_pw = jax.random.normal(kp, (Cout, Cin, 1, 1), dtype=jnp.float32) * 0.1

    out = depthwise_separable_conv(x, w_dw, w_pw, kernel_size=K, pad=pad)
    out = jax.block_until_ready(out)

    ref = _reference(x, w_dw, w_pw, pad=pad)
    assert out.shape == (B, Cout, H, W)
    assert jnp.allclose(out, ref, atol=1e-4, rtol=1e-4)

    print("KERNEL_OK")
</pallas_src>

<mosaic_0001>
module attributes {stable_mosaic.version = 11 : i64} {
  func.func @_dsconv_kernel(%arg0: i32, %arg1: memref<2x4x256xf32, #tpu.memory_space<vmem>>, %arg2: memref<9x8x4xf32, #tpu.memory_space<vmem>>, %arg3: memref<9x1x256xf32, #tpu.memory_space<vmem>>, %arg4: memref<2x8x256xf32, #tpu.memory_space<vmem>>) attributes {dimension_semantics = [#tpu.dimension_semantics<parallel>], iteration_bounds = array<i64: 1>, scalar_prefetch = 0 : i64, scratch_operands = 0 : i64, tpu.core_type = #tpu.core_type<tc>, window_params = [{transform_indices = @transform_0, window_bounds = array<i64: 2, 4, 256>}, {pipeline_mode = #tpu.pipeline_mode<synchronous>, transform_indices = @transform_1, window_bounds = array<i64: 9, 8, 4>}, {pipeline_mode = #tpu.pipeline_mode<synchronous>, transform_indices = @transform_2, window_bounds = array<i64: 9, 1, 256>}, {transform_indices = @transform_3, window_bounds = array<i64: 2, 8, 256>}]} {
    %c0 = arith.constant 0 : index
    %c0_0 = arith.constant 0 : index
    %c0_1 = arith.constant 0 : index
    %0 = vector.load %arg1[%c0, %c0_0, %c0_1] : memref<2x4x256xf32, #tpu.memory_space<vmem>>, vector<2x4x256xf32>
    %c0_2 = arith.constant 0 : index
    %c0_3 = arith.constant 0 : index
    %c0_4 = arith.constant 0 : index
    %1 = vector.load %arg3[%c0_2, %c0_3, %c0_4] : memref<9x1x256xf32, #tpu.memory_space<vmem>>, vector<9x1x256xf32>
    %c0_5 = arith.constant 0 : index
    %c0_6 = arith.constant 0 : index
    %c0_7 = arith.constant 0 : index
    %2 = vector.load %arg2[%c0_5, %c0_6, %c0_7] : memref<9x8x4xf32, #tpu.memory_space<vmem>>, vector<9x8x4xf32>
    %3 = vector.shape_cast %2 : vector<9x8x4xf32> to vector<9x1x8x4xf32>
    %4 = vector.shape_cast %3 : vector<9x1x8x4xf32> to vector<9x1x8x4xf32>
    %5 = vector.broadcast %4 : vector<9x1x8x4xf32> to vector<9x2x8x4xf32>
    %cst = arith.constant 0.000000e+00 : f32
    %6 = vector.broadcast %cst : f32 to vector<2x8x256xf32>
    %c17_i32 = arith.constant 17 : i32
    %7 = tpu.dynamic_rotate %0 by %c17_i32 dim 2 : vector<2x4x256xf32>, i32 -> vector<2x4x256xf32>
    %8 = vector.extract_strided_slice %1 {offsets = [0, 0, 0], sizes = [1, 1, 256], strides = [1, 1, 1]} : vector<9x1x256xf32> to vector<1x1x256xf32>
    %9 = vector.shape_cast %8 : vector<1x1x256xf32> to vector<1x256xf32>
    %10 = vector.shape_cast %9 : vector<1x256xf32> to vector<1x1x256xf32>
    %11 = vector.broadcast %10 : vector<1x1x256xf32> to vector<2x4x256xf32>
    %12 = arith.mulf %7, %11 : vector<2x4x256xf32>
    %13 = vector.extract_strided_slice %5 {offsets = [0, 0, 0, 0], sizes = [1, 2, 8, 4], strides = [1, 1, 1, 1]} : vector<9x2x8x4xf32> to vector<1x2x8x4xf32>
    %14 = vector.shape_cast %13 : vector<1x2x8x4xf32> to vector<2x8x4xf32>
    "tpu.trace_start"() <{level = 10 : i32, message = "boc,bcn->bon"}> : () -> ()
    %cst_8 = arith.constant dense<0.000000e+00> : vector<2x8x256xf32>
    %15 = tpu.matmul %14, %12, %cst_8 {dimension_numbers = #tpu.dot_dimension_numbers<[2], [1], [1], [2], [0, 0, 0, 1, 1, 2], [0], [0]>} : vector<2x8x4xf32>, vector<2x4x256xf32>, vector<2x8x256xf32> -> vector<2x8x256xf32>
    "tpu.trace_stop"() : () -> ()
    %16 = arith.addf %6, %15 : vector<2x8x256xf32>
    %c16_i32 = arith.constant 16 : i32
    %17 = tpu.dynamic_rotate %0 by %c16_i32 dim 2 : vector<2x4x256xf32>, i32 -> vector<2x4x256xf32>
    %18 = vector.extract_strided_slice %1 {offsets = [1, 0, 0], sizes = [1, 1, 256], strides = [1, 1, 1]} : vector<9x1x256xf32> to vector<1x1x256xf32>
    %19 = vector.shape_cast %18 : vector<1x1x256xf32> to vector<1x256xf32>
    %20 = vector.shape_cast %19 : vector<1x256xf32> to vector<1x1x256xf32>
    %21 = vector.broadcast %20 : vector<1x1x256xf32> to vector<2x4x256xf32>
    %22 = arith.mulf %17, %21 : vector<2x4x256xf32>
    %23 = vector.extract_strided_slice %5 {offsets = [1, 0, 0, 0], sizes = [1, 2, 8, 4], strides = [1, 1, 1, 1]} : vector<9x2x8x4xf32> to vector<1x2x8x4xf32>
    %24 = vector.shape_cast %23 : vector<1x2x8x4xf32> to vector<2x8x4xf32>
    "tpu.trace_start"() <{level = 10 : i32, message = "boc,bcn->bon"}> : () -> ()
    %cst_9 = arith.constant dense<0.000000e+00> : vector<2x8x256xf32>
    %25 = tpu.matmul %24, %22, %cst_9 {dimension_numbers = #tpu.dot_dimension_numbers<[2], [1], [1], [2], [0, 0, 0, 1, 1, 2], [0], [0]>} : vector<2x8x4xf32>, vector<2x4x256xf32>, vector<2x8x256xf32> -> vector<2x8x256xf32>
    "tpu.trace_stop"() : () -> ()
    %26 = arith.addf %16, %25 : vector<2x8x256xf32>
    %c15_i32 = arith.constant 15 : i32
    %27 = tpu.dynamic_rotate %0 by %c15_i32 dim 2 : vector<2x4x256xf32>, i32 -> vector<2x4x256xf32>
    %28 = vector.extract_strided_slice %1 {offsets = [2, 0, 0], sizes = [1, 1, 256], strides = [1, 1, 1]} : vector<9x1x256xf32> to vector<1x1x256xf32>
    %29 = vector.shape_cast %28 : vector<1x1x256xf32> to vector<1x256xf32>
    %30 = vector.shape_cast %29 : vector<1x256xf32> to vector<1x1x256xf32>
    %31 = vector.broadcast %30 : vector<1x1x256xf32> to vector<2x4x256xf32>
    %32 = arith.mulf %27, %31 : vector<2x4x256xf32>
    %33 = vector.extract_strided_slice %5 {offsets = [2, 0, 0, 0], sizes = [1, 2, 8, 4], strides = [1, 1, 1, 1]} : vector<9x2x8x4xf32> to vector<1x2x8x4xf32>
    %34 = vector.shape_cast %33 : vector<1x2x8x4xf32> to vector<2x8x4xf32>
    "tpu.trace_start"() <{level = 10 : i32, message = "boc,bcn->bon"}> : () -> ()
    %cst_10 = arith.constant dense<0.000000e+00> : vector<2x8x256xf32>
    %35 = tpu.matmul %34, %32, %cst_10 {dimension_numbers = #tpu.dot_dimension_numbers<[2], [1], [1], [2], [0, 0, 0, 1, 1, 2], [0], [0]>} : vector<2x8x4xf32>, vector<2x4x256xf32>, vector<2x8x256xf32> -> vector<2x8x256xf32>
    "tpu.trace_stop"() : () -> ()
    %36 = arith.addf %26, %35 : vector<2x8x256xf32>
    %c1_i32 = arith.constant 1 : i32
    %37 = tpu.dynamic_rotate %0 by %c1_i32 dim 2 : vector<2x4x256xf32>, i32 -> vector<2x4x256xf32>
    %38 = vector.extract_strided_slice %1 {offsets = [3, 0, 0], sizes = [1, 1, 256], strides = [1, 1, 1]} : vector<9x1x256xf32> to vector<1x1x256xf32>
    %39 = vector.shape_cast %38 : vector<1x1x256xf32> to vector<1x256xf32>
    %40 = vector.shape_cast %39 : vector<1x256xf32> to vector<1x1x256xf32>
    %41 = vector.broadcast %40 : vector<1x1x256xf32> to vector<2x4x256xf32>
    %42 = arith.mulf %37, %41 : vector<2x4x256xf32>
    %43 = vector.extract_strided_slice %5 {offsets = [3, 0, 0, 0], sizes = [1, 2, 8, 4], strides = [1, 1, 1, 1]} : vector<9x2x8x4xf32> to vector<1x2x8x4xf32>
    %44 = vector.shape_cast %43 : vector<1x2x8x4xf32> to vector<2x8x4xf32>
    "tpu.trace_start"() <{level = 10 : i32, message = "boc,bcn->bon"}> : () -> ()
    %cst_11 = arith.constant dense<0.000000e+00> : vector<2x8x256xf32>
    %45 = tpu.matmul %44, %42, %cst_11 {dimension_numbers = #tpu.dot_dimension_numbers<[2], [1], [1], [2], [0, 0, 0, 1, 1, 2], [0], [0]>} : vector<2x8x4xf32>, vector<2x4x256xf32>, vector<2x8x256xf32> -> vector<2x8x256xf32>
    "tpu.trace_stop"() : () -> ()
    %46 = arith.addf %36, %45 : vector<2x8x256xf32>
    %47 = vector.extract_strided_slice %1 {offsets = [4, 0, 0], sizes = [1, 1, 256], strides = [1, 1, 1]} : vector<9x1x256xf32> to vector<1x1x256xf32>
    %48 = vector.shape_cast %47 : vector<1x1x256xf32> to vector<1x256xf32>
    %49 = vector.shape_cast %48 : vector<1x256xf32> to vector<1x1x256xf32>
    %50 = vector.broadcast %49 : vector<1x1x256xf32> to vector<2x4x256xf32>
    %51 = arith.mulf %0, %50 : vector<2x4x256xf32>
    %52 = vector.extract_strided_slice %5 {offsets = [4, 0, 0, 0], sizes = [1, 2, 8, 4], strides = [1, 1, 1, 1]} : vector<9x2x8x4xf32> to vector<1x2x8x4xf32>
    %53 = vector.shape_cast %52 : vector<1x2x8x4xf32> to vector<2x8x4xf32>
    "tpu.trace_start"() <{level = 10 : i32, message = "boc,bcn->bon"}> : () -> ()
    %cst_12 = arith.constant dense<0.000000e+00> : vector<2x8x256xf32>
    %54 = tpu.matmul %53, %51, %cst_12 {dimension_numbers = #tpu.dot_dimension_numbers<[2], [1], [1], [2], [0, 0, 0, 1, 1, 2], [0], [0]>} : vector<2x8x4xf32>, vector<2x4x256xf32>, vector<2x8x256xf32> -> vector<2x8x256xf32>
    "tpu.trace_stop"() : () -> ()
    %55 = arith.addf %46, %54 : vector<2x8x256xf32>
    %c255_i32 = arith.constant 255 : i32
    %56 = tpu.dynamic_rotate %0 by %c255_i32 dim 2 : vector<2x4x256xf32>, i32 -> vector<2x4x256xf32>
    %57 = vector.extract_strided_slice %1 {offsets = [5, 0, 0], sizes = [1, 1, 256], strides = [1, 1, 1]} : vector<9x1x256xf32> to vector<1x1x256xf32>
    %58 = vector.shape_cast %57 : vector<1x1x256xf32> to vector<1x256xf32>
    %59 = vector.shape_cast %58 : vector<1x256xf32> to vector<1x1x256xf32>
    %60 = vector.broadcast %59 : vector<1x1x256xf32> to vector<2x4x256xf32>
    %61 = arith.mulf %56, %60 : vector<2x4x256xf32>
    %62 = vector.extract_strided_slice %5 {offsets = [5, 0, 0, 0], sizes = [1, 2, 8, 4], strides = [1, 1, 1, 1]} : vector<9x2x8x4xf32> to vector<1x2x8x4xf32>
    %63 = vector.shape_cast %62 : vector<1x2x8x4xf32> to vector<2x8x4xf32>
    "tpu.trace_start"() <{level = 10 : i32, message = "boc,bcn->bon"}> : () -> ()
    %cst_13 = arith.constant dense<0.000000e+00> : vector<2x8x256xf32>
    %64 = tpu.matmul %63, %61, %cst_13 {dimension_numbers = #tpu.dot_dimension_numbers<[2], [1], [1], [2], [0, 0, 0, 1, 1, 2], [0], [0]>} : vector<2x8x4xf32>, vector<2x4x256xf32>, vector<2x8x256xf32> -> vector<2x8x256xf32>
    "tpu.trace_stop"() : () -> ()
    %65 = arith.addf %55, %64 : vector<2x8x256xf32>
    %c241_i32 = arith.constant 241 : i32
    %66 = tpu.dynamic_rotate %0 by %c241_i32 dim 2 : vector<2x4x256xf32>, i32 -> vector<2x4x256xf32>
    %67 = vector.extract_strided_slice %1 {offsets = [6, 0, 0], sizes = [1, 1, 256], strides = [1, 1, 1]} : vector<9x1x256xf32> to vector<1x1x256xf32>
    %68 = vector.shape_cast %67 : vector<1x1x256xf32> to vector<1x256xf32>
    %69 = vector.shape_cast %68 : vector<1x256xf32> to vector<1x1x256xf32>
    %70 = vector.broadcast %69 : vector<1x1x256xf32> to vector<2x4x256xf32>
    %71 = arith.mulf %66, %70 : vector<2x4x256xf32>
    %72 = vector.extract_strided_slice %5 {offsets = [6, 0, 0, 0], sizes = [1, 2, 8, 4], strides = [1, 1, 1, 1]} : vector<9x2x8x4xf32> to vector<1x2x8x4xf32>
    %73 = vector.shape_cast %72 : vector<1x2x8x4xf32> to vector<2x8x4xf32>
    "tpu.trace_start"() <{level = 10 : i32, message = "boc,bcn->bon"}> : () -> ()
    %cst_14 = arith.constant dense<0.000000e+00> : vector<2x8x256xf32>
    %74 = tpu.matmul %73, %71, %cst_14 {dimension_numbers = #tpu.dot_dimension_numbers<[2], [1], [1], [2], [0, 0, 0, 1, 1, 2], [0], [0]>} : vector<2x8x4xf32>, vector<2x4x256xf32>, vector<2x8x256xf32> -> vector<2x8x256xf32>
    "tpu.trace_stop"() : () -> ()
    %75 = arith.addf %65, %74 : vector<2x8x256xf32>
    %c240_i32 = arith.constant 240 : i32
    %76 = tpu.dynamic_rotate %0 by %c240_i32 dim 2 : vector<2x4x256xf32>, i32 -> vector<2x4x256xf32>
    %77 = vector.extract_strided_slice %1 {offsets = [7, 0, 0], sizes = [1, 1, 256], strides = [1, 1, 1]} : vector<9x1x256xf32> to vector<1x1x256xf32>
    %78 = vector.shape_cast %77 : vector<1x1x256xf32> to vector<1x256xf32>
    %79 = vector.shape_cast %78 : vector<1x256xf32> to vector<1x1x256xf32>
    %80 = vector.broadcast %79 : vector<1x1x256xf32> to vector<2x4x256xf32>
    %81 = arith.mulf %76, %80 : vector<2x4x256xf32>
    %82 = vector.extract_strided_slice %5 {offsets = [7, 0, 0, 0], sizes = [1, 2, 8, 4], strides = [1, 1, 1, 1]} : vector<9x2x8x4xf32> to vector<1x2x8x4xf32>
    %83 = vector.shape_cast %82 : vector<1x2x8x4xf32> to vector<2x8x4xf32>
    "tpu.trace_start"() <{level = 10 : i32, message = "boc,bcn->bon"}> : () -> ()
    %cst_15 = arith.constant dense<0.000000e+00> : vector<2x8x256xf32>
    %84 = tpu.matmul %83, %81, %cst_15 {dimension_numbers = #tpu.dot_dimension_numbers<[2], [1], [1], [2], [0, 0, 0, 1, 1, 2], [0], [0]>} : vector<2x8x4xf32>, vector<2x4x256xf32>, vector<2x8x256xf32> -> vector<2x8x256xf32>
    "tpu.trace_stop"() : () -> ()
    %85 = arith.addf %75, %84 : vector<2x8x256xf32>
    %c239_i32 = arith.constant 239 : i32
    %86 = tpu.dynamic_rotate %0 by %c239_i32 dim 2 : vector<2x4x256xf32>, i32 -> vector<2x4x256xf32>
    %87 = vector.extract_strided_slice %1 {offsets = [8, 0, 0], sizes = [1, 1, 256], strides = [1, 1, 1]} : vector<9x1x256xf32> to vector<1x1x256xf32>
    %88 = vector.shape_cast %87 : vector<1x1x256xf32> to vector<1x256xf32>
    %89 = vector.shape_cast %88 : vector<1x256xf32> to vector<1x1x256xf32>
    %90 = vector.broadcast %89 : vector<1x1x256xf32> to vector<2x4x256xf32>
    %91 = arith.mulf %86, %90 : vector<2x4x256xf32>
    %92 = vector.extract_strided_slice %5 {offsets = [8, 0, 0, 0], sizes = [1, 2, 8, 4], strides = [1, 1, 1, 1]} : vector<9x2x8x4xf32> to vector<1x2x8x4xf32>
    %93 = vector.shape_cast %92 : vector<1x2x8x4xf32> to vector<2x8x4xf32>
    "tpu.trace_start"() <{level = 10 : i32, message = "boc,bcn->bon"}> : () -> ()
    %cst_16 = arith.constant dense<0.000000e+00> : vector<2x8x256xf32>
    %94 = tpu.matmul %93, %91, %cst_16 {dimension_numbers = #tpu.dot_dimension_numbers<[2], [1], [1], [2], [0, 0, 0, 1, 1, 2], [0], [0]>} : vector<2x8x4xf32>, vector<2x4x256xf32>, vector<2x8x256xf32> -> vector<2x8x256xf32>
    "tpu.trace_stop"() : () -> ()
    %95 = arith.addf %85, %94 : vector<2x8x256xf32>
    %c0_17 = arith.constant 0 : index
    %c0_18 = arith.constant 0 : index
    %c0_19 = arith.constant 0 : index
    %96 = vector.load %arg4[%c0_17, %c0_18, %c0_19] : memref<2x8x256xf32, #tpu.memory_space<vmem>>, vector<2x8x256xf32>
    tpu.vector_store %arg4[%c0_17, %c0_18, %c0_19], %95 {strides = array<i32>} : memref<2x8x256xf32, #tpu.memory_space<vmem>>, vector<2x8x256xf32>,
    return
  }
  func.func @transform_0(%arg0: i32) -> (i32, i32, i32) {
    %c0_i32 = arith.constant 0 : i32
    %c0_i32_0 = arith.constant 0 : i32
    %c0_i32_1 = arith.constant 0 : i32
    return %arg0, %c0_i32, %c0_i32_0 : i32, i32, i32
  }
  func.func @transform_1(%arg0: i32) -> (i32, i32, i32) {
    %c0_i32 = arith.constant 0 : i32
    %c0_i32_0 = arith.constant 0 : i32
    %c0_i32_1 = arith.constant 0 : i32
    %c0_i32_2 = arith.constant 0 : i32
    return %c0_i32, %c0_i32_0, %c0_i32_1 : i32, i32, i32
  }
  func.func @transform_2(%arg0: i32) -> (i32, i32, i32) {
    %c0_i32 = arith.constant 0 : i32
    %c0_i32_0 = arith.constant 0 : i32
    %c0_i32_1 = arith.constant 0 : i32
    %c0_i32_2 = arith.constant 0 : i32
    return %c0_i32, %c0_i32_0, %c0_i32_1 : i32, i32, i32
  }
  func.func @transform_3(%arg0: i32) -> (i32, i32, i32) {
    %c0_i32 = arith.constant 0 : i32
    %c0_i32_0 = arith.constant 0 : i32
    %c0_i32_1 = arith.constant 0 : i32
    return %arg0, %c0_i32, %c0_i32_0 : i32, i32, i32
  }
}

</mosaic_0001>

<llo_original>
// kernel: tpu_custom_call.1
$region0: #{tpu_custom_call.1}
  #allocation0 [shape = 'u32[]', space=smem, size = 0x4, offset = 0x4, fixed_abs, tag = 'smem constant byte address 0x4 - core index']
  #allocation1 [shape = 'u32[144,128]{1,0:T(1,128)}', space=vmem, size = 0x12000, scoped, tag = 'internal scratch']
  %s0 = inlined_call_operand.vmem [shape: f32[2,4,256], index: 0, kind: input, shape index: {}]
  %s1 = inlined_call_operand.vmem [shape: f32[9,8,4], index: 1, kind: input, shape index: {}]
  %s2 = inlined_call_operand.vmem [shape: f32[9,1,256], index: 2, kind: input, shape index: {}]
  %s3 = inlined_call_operand.hbm [shape: f32[2,8,256], index: 3, kind: output, shape index: {}]
  %s4 = sld [smem:[#allocation0]]
  $region22: #{tpu_custom_call.1} parent=0
    _
  %s6 = ssub.s32 1, %s4
  %s7 = scalar_select 0, %s6, %s4
  $region1: #{tpu_custom_call.1} parent=0
    #allocation2 [shape = 'u8[16384]{0}', space=vmem, size = 0x4000, scoped, tag = 'output window, operand 0, single buffered']
    #allocation3 [shape = 's32[1]{0}', space=sflag, size = 0x4, scoped, tag = 'scoped memory for tpu_custom_call.1']
    %8 = vsyncpa [#allocation3], 0
    // Predicated region
    $region2: #{tpu_custom_call.1} parent=1 // pred_check
      _
    $region3: #{tpu_custom_call.1} parent=1 // pred_check_branch
      %10 = sbr.rel (0) target = $region5
    $region4: #{tpu_custom_call.1} parent=1 // pred_region
      _
    $region5: #{tpu_custom_call.1} parent=1 // pred_fallthru
      _
    // Predicated region
    $region6: #{tpu_custom_call.1} parent=1 // pred_check
      _
    $region7: #{tpu_custom_call.1} parent=1 // pred_check_branch
      %12 = sbr.rel (0) target = $region9
    $region8: #{tpu_custom_call.1} parent=1 // pred_region
      _
    $region9: #{tpu_custom_call.1} parent=1 // pred_fallthru
      _
    // Predicated region
    $region10: #{tpu_custom_call.1} parent=1 // pred_check
      _
    $region11: #{tpu_custom_call.1} parent=1 // pred_check_branch
      %14 = sbr.rel (0) target = $region13
    $region12: #{tpu_custom_call.1} parent=1 // pred_region
      _
    $region13: #{tpu_custom_call.1} parent=1 // pred_fallthru
      _
    %v15 = vld [vmem:[%s0] sm:$0xff]
    %v16 = vld [vmem:[%s0 + $0x8] sm:$0xff]
    %v17 = vld [vmem:[%s2] sm:$0x3]
    %v18 = vld [vmem:[%s2 + $0x2] sm:$0x3]
    %v19 = vld [vmem:[%s2 + $0x4] sm:$0x3]
    %v20 = vld [vmem:[%s2 + $0x6] sm:$0x3]
    %v21 = vld [vmem:[%s2 + $0x8] sm:$0x3]
    %v22 = vld [vmem:[%s2 + $0xa] sm:$0x3]
    %v23 = vld [vmem:[%s2 + $0xc] sm:$0x3]
    %v24 = vld [vmem:[%s2 + $0xe] sm:$0x3]
    %v25 = vld [vmem:[%s2 + $0x10] sm:$0x3]
    %v26 = vld [vmem:[%s1] sm:$0xff]
    %v27 = vld [vmem:[%s1 + $0x8] sm:$0xff]
    %v28 = vld [vmem:[%s1 + $0x10] sm:$0xff]
    %v29 = vld [vmem:[%s1 + $0x18] sm:$0xff]
    %v30 = vld [vmem:[%s1 + $0x20] sm:$0xff]
    %v31 = vld [vmem:[%s1 + $0x28] sm:$0xff]
    %v32 = vld [vmem:[%s1 + $0x30] sm:$0xff]
    %v33 = vld [vmem:[%s1 + $0x38] sm:$0xff]
    %v34 = vld [vmem:[%s1 + $0x40] sm:$0xff]
    %v37 = vcombine.high %v15, %v15
    %v38 = vcombine.high %v16, %v16
    %41 = vrot.lane.b32.xlu0 %v15, 17
    %v42 = vpop.permute.xlu0 %41
    %43 = vrot.lane.b32.xlu0 %v16, 17
    %v44 = vpop.permute.xlu0 %43
    %45 = vrot.lane.b32.xlu0 %v37, 17
    %v46 = vpop.permute.xlu0 %45
    %47 = vrot.lane.b32.xlu0 %v38, 17
    %v48 = vpop.permute.xlu0 %47
    %v49 = vlaneseq
    %v50 = vand.u32 %v49, 127
    %vm51 = vcmp.lt.s32.totalorder %v50, 17
    %v52 = vsel %vm51, %v42, %v46
    %v53 = vsel %vm51, %v44, %v48
    %v54 = vsel %vm51, %v46, %v42
    %v55 = vsel %vm51, %v48, %v44
    %v57 = vlaneseq
    %v58 = vshrl.u32 %v57, 7
    %v59 = vsub.s32 0, %v58
    %v60 = vrot.slane %v17, %v59
    %v61 = vlaneseq
    %v62 = vshrl.u32 %v61, 7
    %v63 = vsub.s32 1, %v62
    %v64 = vrot.slane %v17, %v63
    %v67 = vmul.f32 %v54, %v60
    %v68 = vmul.f32 %v52, %v64
    %v69 = vmul.f32 %v55, %v60
    %v70 = vmul.f32 %v53, %v64
    %71 = vrot.lane.b32.xlu0 %v15, 16
    %v72 = vpop.permute.xlu0 %71
    %73 = vrot.lane.b32.xlu0 %v16, 16
    %v74 = vpop.permute.xlu0 %73
    %75 = vrot.lane.b32.xlu0 %v37, 16
    %v76 = vpop.permute.xlu0 %75
    %77 = vrot.lane.b32.xlu0 %v38, 16
    %v78 = vpop.permute.xlu0 %77
    %vm79 = vcmp.lt.s32.totalorder %v50, 16
    %v80 = vsel %vm79, %v72, %v76
    %v81 = vsel %vm79, %v74, %v78
    %v82 = vsel %vm79, %v76, %v72
    %v83 = vsel %vm79, %v78, %v74
    %v85 = vlaneseq
    %v86 = vshrl.u32 %v85, 7
    %v87 = vsub.s32 0, %v86
    %v88 = vrot.slane %v18, %v87
    %v89 = vlaneseq
    %v90 = vshrl.u32 %v89, 7
    %v91 = vsub.s32 1, %v90
    %v92 = vrot.slane %v18, %v91
    %v95 = vmul.f32 %v82, %v88
    %v96 = vmul.f32 %v80, %v92
    %v97 = vmul.f32 %v83, %v88
    %v98 = vmul.f32 %v81, %v92
    %vm99 = vcmask 31744
    %v101 = vsel %vm99, %v27, 0
    %vm103 = vcmask 1043456
    %v105 = vsel %vm103, %v95, 0
    %v108 = vsel %vm103, %v96, 0
    %110 = vmatprep.subr.mxu0 0.0
    %111 = vmatpush1.msra.mxu0 0.0
    %112 = vmatprep.subr.mxu0 0.0
    %113 = vmatpush1.msra.mxu0 0.0
    %114 = vmatprep.subr.mxu0 0.0
    %115 = vmatpush1.msra.mxu0 0.0
    %116 = vmatprep.subr.mxu0 0.0
    %117 = vmatpush1.msra.mxu0 0.0
    %118 = vmatprep.subr.mxu0 0.0
    %119 = vmatpush1.msra.mxu0 0.0
    %120 = vmatprep.subr.mxu0 0.0
    %121 = vmatpush1.msra.mxu0 0.0
    %122 = vmatprep.subr.mxu0 0.0
    %123 = vmatpush1.msra.mxu0 0.0
    %124 = vmatprep.subr.mxu0 0.0
    %125 = vmatpush1.msra.mxu0 0.0
    %126 = vmatprep.subr.mxu0 0.0
    %127 = vmatpush1.msra.mxu0 0.0
    %128 = vmatprep.subr.mxu0 0.0
    %129 = vmatpush1.msra.mxu0 0.0
    %130 = vmatprep.subr.mxu0 0.0
    %131 = vmatpush1.msra.mxu0 0.0
    %132 = vmatprep.subr.mxu0 0.0
    %133 = vmatpush1.msra.mxu0 0.0
    %134 = vmatprep.subr.mxu0 0.0
    %135 = vmatpush1.msra.mxu0 0.0
    %136 = vmatprep.subr.mxu0 0.0
    %137 = vmatpush1.msra.mxu0 0.0
    %138 = vmatprep.subr.mxu0 0.0
    %139 = vmatpush1.msra.mxu0 0.0
    %140 = vmatprep.subr.mxu0 %v108
    %141 = vmatpush1.msra.mxu0 %v105
    %142 = vmatprep.subr.mxu0 0.0
    %143 = vmatpush2.msra.mxu0 0.0
    %144 = vmatprep.subr.mxu0 0.0
    %145 = vmatpush2.msra.mxu0 0.0
    %146 = vmatprep.subr.mxu0 0.0
    %147 = vmatpush2.msra.mxu0 0.0
    %148 = vmatprep.subr.mxu0 0.0
    %149 = vmatpush2.msra.mxu0 0.0
    %150 = vmatprep.subr.mxu0 0.0
    %151 = vmatpush2.msra.mxu0 0.0
    %152 = vmatprep.subr.mxu0 0.0
    %153 = vmatpush2.msra.mxu0 0.0
    %154 = vmatprep.subr.mxu0 0.0
    %155 = vmatpush2.msra.mxu0 0.0
    %156 = vmatprep.subr.mxu0 0.0
    %157 = vmatpush2.msra.mxu0 0.0
    %158 = vmatprep.subr.mxu0 0.0
    %159 = vmatpush2.msra.mxu0 0.0
    %160 = vmatprep.subr.mxu0 0.0
    %161 = vmatpush2.msra.mxu0 0.0
    %162 = vmatprep.subr.mxu0 0.0
    %163 = vmatpush2.msra.mxu0 0.0
    %164 = vmatprep.subr.mxu0 0.0
    %165 = vmatpush2.msra.mxu0 0.0
    %166 = vmatprep.subr.mxu0 0.0
    %167 = vmatpush2.msra.mxu0 0.0
    %168 = vmatprep.subr.mxu0 0.0
    %169 = vmatpush2.msra.mxu0 0.0
    %170 = vmatprep.subr.mxu0 0.0
    %171 = vmatpush2.msra.mxu0 0.0
    %172 = vmatprep.subr.mxu0 0.0
    %173 = vmatpush2.msra.mxu0 0.0
    %174 = vmatprep.mubr.f32.mxu0 0.0
    %175 = vmatmul.mubr.f32.gmra.mxu0 %v101
    %v176 = vpop.f32.mrf.mxu0
    %v177 = vadd.f32 0.0, %v176
    %v178 = vpop.f32.mrf.mxu0
    %v179 = vadd.f32 0.0, %v178
    %180 = vdwg.mxu0
    %v182 = vsel %vm103, %v97, 0
    %v185 = vsel %vm103, %v98, 0
    %187 = vmatprep.subr.mxu0 0.0
    %188 = vmatpush1.msra.mxu0 0.0
    %189 = vmatprep.subr.mxu0 0.0
    %190 = vmatpush1.msra.mxu0 0.0
    %191 = vmatprep.subr.mxu0 0.0
    %192 = vmatpush1.msra.mxu0 0.0
    %193 = vmatprep.subr.mxu0 0.0
    %194 = vmatpush1.msra.mxu0 0.0
    %195 = vmatprep.subr.mxu0 0.0
    %196 = vmatpush1.msra.mxu0 0.0
    %197 = vmatprep.subr.mxu0 0.0
    %198 = vmatpush1.msra.mxu0 0.0
    %199 = vmatprep.subr.mxu0 0.0
    %200 = vmatpush1.msra.mxu0 0.0
    %201 = vmatprep.subr.mxu0 0.0
    %202 = vmatpush1.msra.mxu0 0.0
    %203 = vmatprep.subr.mxu0 0.0
    %204 = vmatpush1.msra.mxu0 0.0
    %205 = vmatprep.subr.mxu0 0.0
    %206 = vmatpush1.msra.mxu0 0.0
    %207 = vmatprep.subr.mxu0 0.0
    %208 = vmatpush1.msra.mxu0 0.0
    %209 = vmatprep.subr.mxu0 0.0
    %210 = vmatpush1.msra.mxu0 0.0
    %211 = vmatprep.subr.mxu0 0.0
    %212 = vmatpush1.msra.mxu0 0.0
    %213 = vmatprep.subr.mxu0 0.0
    %214 = vmatpush1.msra.mxu0 0.0
    %215 = vmatprep.subr.mxu0 0.0
    %216 = vmatpush1.msra.mxu0 0.0
    %217 = vmatprep.subr.mxu0 %v185
    %218 = vmatpush1.msra.mxu0 %v182
    %219 = vmatprep.subr.mxu0 0.0
    %220 = vmatpush2.msra.mxu0 0.0
    %221 = vmatprep.subr.mxu0 0.0
    %222 = vmatpush2.msra.mxu0 0.0
    %223 = vmatprep.subr.mxu0 0.0
    %224 = vmatpush2.msra.mxu0 0.0
    %225 = vmatprep.subr.mxu0 0.0
    %226 = vmatpush2.msra.mxu0 0.0
    %227 = vmatprep.subr.mxu0 0.0
    %228 = vmatpush2.msra.mxu0 0.0
    %229 = vmatprep.subr.mxu0 0.0
    %230 = vmatpush2.msra.mxu0 0.0
    %231 = vmatprep.subr.mxu0 0.0
    %232 = vmatpush2.msra.mxu0 0.0
    %233 = vmatprep.subr.mxu0 0.0
    %234 = vmatpush2.msra.mxu0 0.0
    %235 = vmatprep.subr.mxu0 0.0
    %236 = vmatpush2.msra.mxu0 0.0
    %237 = vmatprep.subr.mxu0 0.0
    %238 = vmatpush2.msra.mxu0 0.0
    %239 = vmatprep.subr.mxu0 0.0
    %240 = vmatpush2.msra.mxu0 0.0
    %241 = vmatprep.subr.mxu0 0.0
    %242 = vmatpush2.msra.mxu0 0.0
    %243 = vmatprep.subr.mxu0 0.0
    %244 = vmatpush2.msra.mxu0 0.0
    %245 = vmatprep.subr.mxu0 0.0
    %246 = vmatpush2.msra.mxu0 0.0
    %247 = vmatprep.subr.mxu0 0.0
    %248 = vmatpush2.msra.mxu0 0.0
    %249 = vmatprep.subr.mxu0 0.0
    %250 = vmatpush2.msra.mxu0 0.0
    %251 = vmatprep.mubr.f32.mxu0 0.0
    %252 = vmatmul.mubr.f32.gmra.mxu0 %v101
    %v253 = vpop.f32.mrf.mxu0
    %v254 = vadd.f32 0.0, %v253
    %v255 = vpop.f32.mrf.mxu0
    %v256 = vadd.f32 0.0, %v255
    %257 = vdwg.mxu0
    %v259 = vsel %vm99, %v26, 0
    %v262 = vsel %vm103, %v67, 0
    %v265 = vsel %vm103, %v68, 0
    %267 = vmatprep.subr.mxu0 0.0
    %268 = vmatpush1.msra.mxu0 0.0
    %269 = vmatprep.subr.mxu0 0.0
    %270 = vmatpush1.msra.mxu0 0.0
    %271 = vmatprep.subr.mxu0 0.0
    %272 = vmatpush1.msra.mxu0 0.0
    %273 = vmatprep.subr.mxu0 0.0
    %274 = vmatpush1.msra.mxu0 0.0
    %275 = vmatprep.subr.mxu0 0.0
    %276 = vmatpush1.msra.mxu0 0.0
    %277 = vmatprep.subr.mxu0 0.0
    %278 = vmatpush1.msra.mxu0 0.0
    %279 = vmatprep.subr.mxu0 0.0
    %280 = vmatpush1.msra.mxu0 0.0
    %281 = vmatprep.subr.mxu0 0.0
    %282 = vmatpush1.msra.mxu0 0.0
    %283 = vmatprep.subr.mxu0 0.0
    %284 = vmatpush1.msra.mxu0 0.0
    %285 = vmatprep.subr.mxu0 0.0
    %286 = vmatpush1.msra.mxu0 0.0
    %287 = vmatprep.subr.mxu0 0.0
    %288 = vmatpush1.msra.mxu0 0.0
    %289 = vmatprep.subr.mxu0 0.0
    %290 = vmatpush1.msra.mxu0 0.0
    %291 = vmatprep.subr.mxu0 0.0
    %292 = vmatpush1.msra.mxu0 0.0
    %293 = vmatprep.subr.mxu0 0.0
    %294 = vmatpush1.msra.mxu0 0.0
    %295 = vmatprep.subr.mxu0 0.0
    %296 = vmatpush1.msra.mxu0 0.0
    %297 = vmatprep.subr.mxu0 %v265
    %298 = vmatpush1.msra.mxu0 %v262
    %299 = vmatprep.subr.mxu0 0.0
    %300 = vmatpush2.msra.mxu0 0.0
    %301 = vmatprep.subr.mxu0 0.0
    %302 = vmatpush2.msra.mxu0 0.0
    %303 = vmatprep.subr.mxu0 0.0
    %304 = vmatpush2.msra.mxu0 0.0
    %305 = vmatprep.subr.mxu0 0.0
    %306 = vmatpush2.msra.mxu0 0.0
    %307 = vmatprep.subr.mxu0 0.0
    %308 = vmatpush2.msra.mxu0 0.0
    %309 = vmatprep.subr.mxu0 0.0
    %310 = vmatpush2.msra.mxu0 0.0
    %311 = vmatprep.subr.mxu0 0.0
    %312 = vmatpush2.msra.mxu0 0.0
    %313 = vmatprep.subr.mxu0 0.0
    %314 = vmatpush2.msra.mxu0 0.0
    %315 = vmatprep.subr.mxu0 0.0
    %316 = vmatpush2.msra.mxu0 0.0
    %317 = vmatprep.subr.mxu0 0.0
    %318 = vmatpush2.msra.mxu0 0.0
    %319 = vmatprep.subr.mxu0 0.0
    %320 = vmatpush2.msra.mxu0 0.0
    %321 = vmatprep.subr.mxu0 0.0
    %322 = vmatpush2.msra.mxu0 0.0
    %323 = vmatprep.subr.mxu0 0.0
    %324 = vmatpush2.msra.mxu0 0.0
    %325 = vmatprep.subr.mxu0 0.0
    %326 = vmatpush2.msra.mxu0 0.0
    %327 = vmatprep.subr.mxu0 0.0
    %328 = vmatpush2.msra.mxu0 0.0
    %329 = vmatprep.subr.mxu0 0.0
    %330 = vmatpush2.msra.mxu0 0.0
    %331 = vmatprep.mubr.f32.mxu0 0.0
    %332 = vmatmul.mubr.f32.gmra.mxu0 %v259
    %v333 = vpop.f32.mrf.mxu0
    %v334 = vadd.f32 %v177, %v333
    %v335 = vpop.f32.mrf.mxu0
    %v336 = vadd.f32 %v179, %v335
    %337 = vdwg.mxu0
    %v339 = vsel %vm103, %v69, 0
    %v342 = vsel %vm103, %v70, 0
    %344 = vmatprep.subr.mxu0 0.0
    %345 = vmatpush1.msra.mxu0 0.0
    %346 = vmatprep.subr.mxu0 0.0
    %347 = vmatpush1.msra.mxu0 0.0
    %348 = vmatprep.subr.mxu0 0.0
    %349 = vmatpush1.msra.mxu0 0.0
    %350 = vmatprep.subr.mxu0 0.0
    %351 = vmatpush1.msra.mxu0 0.0
    %352 = vmatprep.subr.mxu0 0.0
    %353 = vmatpush1.msra.mxu0 0.0
    %354 = vmatprep.subr.mxu0 0.0
    %355 = vmatpush1.msra.mxu0 0.0
    %356 = vmatprep.subr.mxu0 0.0
    %357 = vmatpush1.msra.mxu0 0.0
    %358 = vmatprep.subr.mxu0 0.0
    %359 = vmatpush1.msra.mxu0 0.0
    %360 = vmatprep.subr.mxu0 0.0
    %361 = vmatpush1.msra.mxu0 0.0
    %362 = vmatprep.subr.mxu0 0.0
    %363 = vmatpush1.msra.mxu0 0.0
    %364 = vmatprep.subr.mxu0 0.0
    %365 = vmatpush1.msra.mxu0 0.0
    %366 = vmatprep.subr.mxu0 0.0
    %367 = vmatpush1.msra.mxu0 0.0
    %368 = vmatprep.subr.mxu0 0.0
    %369 = vmatpush1.msra.mxu0 0.0
    %370 = vmatprep.subr.mxu0 0.0
    %371 = vmatpush1.msra.mxu0 0.0
    %372 = vmatprep.subr.mxu0 0.0
    %373 = vmatpush1.msra.mxu0 0.0
    %374 = vmatprep.subr.mxu0 %v342
    %375 = vmatpush1.msra.mxu0 %v339
    %376 = vmatprep.subr.mxu0 0.0
    %377 = vmatpush2.msra.mxu0 0.0
    %378 = vmatprep.subr.mxu0 0.0
    %379 = vmatpush2.msra.mxu0 0.0
    %380 = vmatprep.subr.mxu0 0.0
    %381 = vmatpush2.msra.mxu0 0.0
    %382 = vmatprep.subr.mxu0 0.0
    %383 = vmatpush2.msra.mxu0 0.0
    %384 = vmatprep.subr.mxu0 0.0
    %385 = vmatpush2.msra.mxu0 0.0
    %386 = vmatprep.subr.mxu0 0.0
    %387 = vmatpush2.msra.mxu0 0.0
    %388 = vmatprep.subr.mxu0 0.0
    %389 = vmatpush2.msra.mxu0 0.0
    %390 = vmatprep.subr.mxu0 0.0
    %391 = vmatpush2.msra.mxu0 0.0
    %392 = vmatprep.subr.mxu0 0.0
    %393 = vmatpush2.msra.mxu0 0.0
    %394 = vmatprep.subr.mxu0 0.0
    %395 = vmatpush2.msra.mxu0 0.0
    %396 = vmatprep.subr.mxu0 0.0
    %397 = vmatpush2.msra.mxu0 0.0
    %398 = vmatprep.subr.mxu0 0.0
    %399 = vmatpush2.msra.mxu0 0.0
    %400 = vmatprep.subr.mxu0 0.0
    %401 = vmatpush2.msra.mxu0 0.0
    %402 = vmatprep.subr.mxu0 0.0
    %403 = vmatpush2.msra.mxu0 0.0
    %404 = vmatprep.subr.mxu0 0.0
    %405 = vmatpush2.msra.mxu0 0.0
    %406 = vmatprep.subr.mxu0 0.0
    %407 = vmatpush2.msra.mxu0 0.0
    %408 = vmatprep.mubr.f32.mxu0 0.0
    %409 = vmatmul.mubr.f32.gmra.mxu0 %v259
    %v410 = vpop.f32.mrf.mxu0
    %v411 = vadd.f32 %v254, %v410
    %v412 = vpop.f32.mrf.mxu0
    %v413 = vadd.f32 %v256, %v412
    %414 = vdwg.mxu0
    %415 = vrot.lane.b32.xlu0 %v15, 15
    %v416 = vpop.permute.xlu0 %415
    %417 = vrot.lane.b32.xlu0 %v16, 15
    %v418 = vpop.permute.xlu0 %417
    %419 = vrot.lane.b32.xlu0 %v37, 15
    %v420 = vpop.permute.xlu0 %419
    %421 = vrot.lane.b32.xlu0 %v38, 15
    %v422 = vpop.permute.xlu0 %421
    %vm423 = vcmp.lt.s32.totalorder %v50, 15
    %v424 = vsel %vm423, %v416, %v420
    %v425 = vsel %vm423, %v418, %v422
    %v426 = vsel %vm423, %v420, %v416
    %v427 = vsel %vm423, %v422, %v418
    %v429 = vlaneseq
    %v430 = vshrl.u32 %v429, 7
    %v431 = vsub.s32 0, %v430
    %v432 = vrot.slane %v19, %v431
    %v433 = vlaneseq
    %v434 = vshrl.u32 %v433, 7
    %v435 = vsub.s32 1, %v434
    %v436 = vrot.slane %v19, %v435
    %v439 = vmul.f32 %v426, %v432
    %v440 = vmul.f32 %v424, %v436
    %v441 = vmul.f32 %v427, %v432
    %v442 = vmul.f32 %v425, %v436
    %v444 = vsel %vm99, %v28, 0
    %v447 = vsel %vm103, %v439, 0
    %v450 = vsel %vm103, %v440, 0
    %452 = vmatprep.subr.mxu0 0.0
    %453 = vmatpush1.msra.mxu0 0.0
    %454 = vmatprep.subr.mxu0 0.0
    %455 = vmatpush1.msra.mxu0 0.0
    %456 = vmatprep.subr.mxu0 0.0
    %457 = vmatpush1.msra.mxu0 0.0
    %458 = vmatprep.subr.mxu0 0.0
    %459 = vmatpush1.msra.mxu0 0.0
    %460 = vmatprep.subr.mxu0 0.0
    %461 = vmatpush1.msra.mxu0 0.0
    %462 = vmatprep.subr.mxu0 0.0
    %463 = vmatpush1.msra.mxu0 0.0
    %464 = vmatprep.subr.mxu0 0.0
    %465 = vmatpush1.msra.mxu0 0.0
    %466 = vmatprep.subr.mxu0 0.0
    %467 = vmatpush1.msra.mxu0 0.0
    %468 = vmatprep.subr.mxu0 0.0
    %469 = vmatpush1.msra.mxu0 0.0
    %470 = vmatprep.subr.mxu0 0.0
    %471 = vmatpush1.msra.mxu0 0.0
    %472 = vmatprep.subr.mxu0 0.0
    %473 = vmatpush1.msra.mxu0 0.0
    %474 = vmatprep.subr.mxu0 0.0
    %475 = vmatpush1.msra.mxu0 0.0
    %476 = vmatprep.subr.mxu0 0.0
    %477 = vmatpush1.msra.mxu0 0.0
    %478 = vmatprep.subr.mxu0 0.0
    %479 = vmatpush1.msra.mxu0 0.0
    %480 = vmatprep.subr.mxu0 0.0
    %481 = vmatpush1.msra.mxu0 0.0
    %482 = vmatprep.subr.mxu0 %v450
    %483 = vmatpush1.msra.mxu0 %v447
    %484 = vmatprep.subr.mxu0 0.0
    %485 = vmatpush2.msra.mxu0 0.0
    %486 = vmatprep.subr.mxu0 0.0
    %487 = vmatpush2.msra.mxu0 0.0
    %488 = vmatprep.subr.mxu0 0.0
    %489 = vmatpush2.msra.mxu0 0.0
    %490 = vmatprep.subr.mxu0 0.0
    %491 = vmatpush2.msra.mxu0 0.0
    %492 = vmatprep.subr.mxu0 0.0
    %493 = vmatpush2.msra.mxu0 0.0
    %494 = vmatprep.subr.mxu0 0.0
    %495 = vmatpush2.msra.mxu0 0.0
    %496 = vmatprep.subr.mxu0 0.0
    %497 = vmatpush2.msra.mxu0 0.0
    %498 = vmatprep.subr.mxu0 0.0
    %499 = vmatpush2.msra.mxu0 0.0
    %500 = vmatprep.subr.mxu0 0.0
    %501 = vmatpush2.msra.mxu0 0.0
    %502 = vmatprep.subr.mxu0 0.0
    %503 = vmatpush2.msra.mxu0 0.0
    %504 = vmatprep.subr.mxu0 0.0
    %505 = vmatpush2.msra.mxu0 0.0
    %506 = vmatprep.subr.mxu0 0.0
    %507 = vmatpush2.msra.mxu0 0.0
    %508 = vmatprep.subr.mxu0 0.0
    %509 = vmatpush2.msra.mxu0 0.0
    %510 = vmatprep.subr.mxu0 0.0
    %511 = vmatpush2.msra.mxu0 0.0
    %512 = vmatprep.subr.mxu0 0.0
    %513 = vmatpush2.msra.mxu0 0.0
    %514 = vmatprep.subr.mxu0 0.0
    %515 = vmatpush2.msra.mxu0 0.0
    %516 = vmatprep.mubr.f32.mxu0 0.0
    %517 = vmatmul.mubr.f32.gmra.mxu0 %v444
    %v518 = vpop.f32.mrf.mxu0
    %v519 = vadd.f32 0.0, %v518
    %v520 = vpop.f32.mrf.mxu0
    %v521 = vadd.f32 0.0, %v520
    %522 = vdwg.mxu0
    %v524 = vsel %vm103, %v441, 0
    %v527 = vsel %vm103, %v442, 0
    %529 = vmatprep.subr.mxu0 0.0
    %530 = vmatpush1.msra.mxu0 0.0
    %531 = vmatprep.subr.mxu0 0.0
    %532 = vmatpush1.msra.mxu0 0.0
    %533 = vmatprep.subr.mxu0 0.0
    %534 = vmatpush1.msra.mxu0 0.0
    %535 = vmatprep.subr.mxu0 0.0
    %536 = vmatpush1.msra.mxu0 0.0
    %537 = vmatprep.subr.mxu0 0.0
    %538 = vmatpush1.msra.mxu0 0.0
    %539 = vmatprep.subr.mxu0 0.0
    %540 = vmatpush1.msra.mxu0 0.0
    %541 = vmatprep.subr.mxu0 0.0
    %542 = vmatpush1.msra.mxu0 0.0
    %543 = vmatprep.subr.mxu0 0.0
    %544 = vmatpush1.msra.mxu0 0.0
    %545 = vmatprep.subr.mxu0 0.0
    %546 = vmatpush1.msra.mxu0 0.0
    %547 = vmatprep.subr.mxu0 0.0
    %548 = vmatpush1.msra.mxu0 0.0
    %549 = vmatprep.subr.mxu0 0.0
    %550 = vmatpush1.msra.mxu0 0.0
    %551 = vmatprep.subr.mxu0 0.0
    %552 = vmatpush1.msra.mxu0 0.0
    %553 = vmatprep.subr.mxu0 0.0
    %554 = vmatpush1.msra.mxu0 0.0
    %555 = vmatprep.subr.mxu0 0.0
    %556 = vmatpush1.msra.mxu0 0.0
    %557 = vmatprep.subr.mxu0 0.0
    %558 = vmatpush1.msra.mxu0 0.0
    %559 = vmatprep.subr.mxu0 %v527
    %560 = vmatpush1.msra.mxu0 %v524
    %561 = vmatprep.subr.mxu0 0.0
    %562 = vmatpush2.msra.mxu0 0.0
    %563 = vmatprep.subr.mxu0 0.0
    %564 = vmatpush2.msra.mxu0 0.0
    %565 = vmatprep.subr.mxu0 0.0
    %566 = vmatpush2.msra.mxu0 0.0
    %567 = vmatprep.subr.mxu0 0.0
    %568 = vmatpush2.msra.mxu0 0.0
    %569 = vmatprep.subr.mxu0 0.0
    %570 = vmatpush2.msra.mxu0 0.0
    %571 = vmatprep.subr.mxu0 0.0
    %572 = vmatpush2.msra.mxu0 0.0
    %573 = vmatprep.subr.mxu0 0.0
    %574 = vmatpush2.msra.mxu0 0.0
    %575 = vmatprep.subr.mxu0 0.0
    %576 = vmatpush2.msra.mxu0 0.0
    %577 = vmatprep.subr.mxu0 0.0
    %578 = vmatpush2.msra.mxu0 0.0
    %579 = vmatprep.subr.mxu0 0.0
    %580 = vmatpush2.msra.mxu0 0.0
    %581 = vmatprep.subr.mxu0 0.0
    %582 = vmatpush2.msra.mxu0 0.0
    %583 = vmatprep.subr.mxu0 0.0
    %584 = vmatpush2.msra.mxu0 0.0
    %585 = vmatprep.subr.mxu0 0.0
    %586 = vmatpush2.msra.mxu0 0.0
    %587 = vmatprep.subr.mxu0 0.0
    %588 = vmatpush2.msra.mxu0 0.0
    %589 = vmatprep.subr.mxu0 0.0
    %590 = vmatpush2.msra.mxu0 0.0
    %591 = vmatprep.subr.mxu0 0.0
    %592 = vmatpush2.msra.mxu0 0.0
    %593 = vmatprep.mubr.f32.mxu0 0.0
    %594 = vmatmul.mubr.f32.gmra.mxu0 %v444
    %v595 = vpop.f32.mrf.mxu0
    %v596 = vadd.f32 0.0, %v595
    %v597 = vpop.f32.mrf.mxu0
    %v598 = vadd.f32 0.0, %v597
    %599 = vdwg.mxu0
    %v600 = vadd.f32 %v334, %v519
    %v601 = vadd.f32 %v336, %v521
    %v602 = vadd.f32 %v411, %v596
    %v603 = vadd.f32 %v413, %v598
    %604 = vrot.lane.b32.xlu0 %v15, 1
    %v605 = vpop.permute.xlu0 %604
    %606 = vrot.lane.b32.xlu0 %v16, 1
    %v607 = vpop.permute.xlu0 %606
    %608 = vrot.lane.b32.xlu0 %v37, 1
    %v609 = vpop.permute.xlu0 %608
    %610 = vrot.lane.b32.xlu0 %v38, 1
    %v611 = vpop.permute.xlu0 %610
    %vm612 = vcmp.lt.s32.totalorder %v50, 1
    %v613 = vsel %vm612, %v605, %v609
    %v614 = vsel %vm612, %v607, %v611
    %v615 = vsel %vm612, %v609, %v605
    %v616 = vsel %vm612, %v611, %v607
    %v618 = vlaneseq
    %v619 = vshrl.u32 %v618, 7
    %v620 = vsub.s32 0, %v619
    %v621 = vrot.slane %v20, %v620
    %v622 = vlaneseq
    %v623 = vshrl.u32 %v622, 7
    %v624 = vsub.s32 1, %v623
    %v625 = vrot.slane %v20, %v624
    %v628 = vmul.f32 %v615, %v621
    %v629 = vmul.f32 %v613, %v625
    %v630 = vmul.f32 %v616, %v621
    %v631 = vmul.f32 %v614, %v625
    %v633 = vsel %vm99, %v29, 0
    %v636 = vsel %vm103, %v628, 0
    %v639 = vsel %vm103, %v629, 0
    %641 = vmatprep.subr.mxu0 0.0
    %642 = vmatpush1.msra.mxu0 0.0
    %643 = vmatprep.subr.mxu0 0.0
    %644 = vmatpush1.msra.mxu0 0.0
    %645 = vmatprep.subr.mxu0 0.0
    %646 = vmatpush1.msra.mxu0 0.0
    %647 = vmatprep.subr.mxu0 0.0
    %648 = vmatpush1.msra.mxu0 0.0
    %649 = vmatprep.subr.mxu0 0.0
    %650 = vmatpush1.msra.mxu0 0.0
    %651 = vmatprep.subr.mxu0 0.0
    %652 = vmatpush1.msra.mxu0 0.0
    %653 = vmatprep.subr.mxu0 0.0
    %654 = vmatpush1.msra.mxu0 0.0
    %655 = vmatprep.subr.mxu0 0.0
    %656 = vmatpush1.msra.mxu0 0.0
    %657 = vmatprep.subr.mxu0 0.0
    %658 = vmatpush1.msra.mxu0 0.0
    %659 = vmatprep.subr.mxu0 0.0
    %660 = vmatpush1.msra.mxu0 0.0
    %661 = vmatprep.subr.mxu0 0.0
    %662 = vmatpush1.msra.mxu0 0.0
    %663 = vmatprep.subr.mxu0 0.0
    %664 = vmatpush1.msra.mxu0 0.0
    %665 = vmatprep.subr.mxu0 0.0
    %666 = vmatpush1.msra.mxu0 0.0
    %667 = vmatprep.subr.mxu0 0.0
    %668 = vmatpush1.msra.mxu0 0.0
    %669 = vmatprep.subr.mxu0 0.0
    %670 = vmatpush1.msra.mxu0 0.0
    %671 = vmatprep.subr.mxu0 %v639
    %672 = vmatpush1.msra.mxu0 %v636
    %673 = vmatprep.subr.mxu0 0.0
    %674 = vmatpush2.msra.mxu0 0.0
    %675 = vmatprep.subr.mxu0 0.0
    %676 = vmatpush2.msra.mxu0 0.0
    %677 = vmatprep.subr.mxu0 0.0
    %678 = vmatpush2.msra.mxu0 0.0
    %679 = vmatprep.subr.mxu0 0.0
    %680 = vmatpush2.msra.mxu0 0.0
    %681 = vmatprep.subr.mxu0 0.0
    %682 = vmatpush2.msra.mxu0 0.0
    %683 = vmatprep.subr.mxu0 0.0
    %684 = vmatpush2.msra.mxu0 0.0
    %685 = vmatprep.subr.mxu0 0.0
    %686 = vmatpush2.msra.mxu0 0.0
    %687 = vmatprep.subr.mxu0 0.0
    %688 = vmatpush2.msra.mxu0 0.0
    %689 = vmatprep.subr.mxu0 0.0
    %690 = vmatpush2.msra.mxu0 0.0
    %691 = vmatprep.subr.mxu0 0.0
    %692 = vmatpush2.msra.mxu0 0.0
    %693 = vmatprep.subr.mxu0 0.0
    %694 = vmatpush2.msra.mxu0 0.0
    %695 = vmatprep.subr.mxu0 0.0
    %696 = vmatpush2.msra.mxu0 0.0
    %697 = vmatprep.subr.mxu0 0.0
    %698 = vmatpush2.msra.mxu0 0.0
    %699 = vmatprep.subr.mxu0 0.0
    %700 = vmatpush2.msra.mxu0 0.0
    %701 = vmatprep.subr.mxu0 0.0
    %702 = vmatpush2.msra.mxu0 0.0
    %703 = vmatprep.subr.mxu0 0.0
    %704 = vmatpush2.msra.mxu0 0.0
    %705 = vmatprep.mubr.f32.mxu0 0.0
    %706 = vmatmul.mubr.f32.gmra.mxu0 %v633
    %v707 = vpop.f32.mrf.mxu0
    %v708 = vadd.f32 0.0, %v707
    %v709 = vpop.f32.mrf.mxu0
    %v710 = vadd.f32 0.0, %v709
    %711 = vdwg.mxu0
    %v713 = vsel %vm103, %v630, 0
    %v716 = vsel %vm103, %v631, 0
    %718 = vmatprep.subr.mxu0 0.0
    %719 = vmatpush1.msra.mxu0 0.0
    %720 = vmatprep.subr.mxu0 0.0
    %721 = vmatpush1.msra.mxu0 0.0
    %722 = vmatprep.subr.mxu0 0.0
    %723 = vmatpush1.msra.mxu0 0.0
    %724 = vmatprep.subr.mxu0 0.0
    %725 = vmatpush1.msra.mxu0 0.0
    %726 = vmatprep.subr.mxu0 0.0
    %727 = vmatpush1.msra.mxu0 0.0
    %728 = vmatprep.subr.mxu0 0.0
    %729 = vmatpush1.msra.mxu0 0.0
    %730 = vmatprep.subr.mxu0 0.0
    %731 = vmatpush1.msra.mxu0 0.0
    %732 = vmatprep.subr.mxu0 0.0
    %733 = vmatpush1.msra.mxu0 0.0
    %734 = vmatprep.subr.mxu0 0.0
    %735 = vmatpush1.msra.mxu0 0.0
    %736 = vmatprep.subr.mxu0 0.0
    %737 = vmatpush1.msra.mxu0 0.0
    %738 = vmatprep.subr.mxu0 0.0
    %739 = vmatpush1.msra.mxu0 0.0
    %740 = vmatprep.subr.mxu0 0.0
    %741 = vmatpush1.msra.mxu0 0.0
    %742 = vmatprep.subr.mxu0 0.0
    %743 = vmatpush1.msra.mxu0 0.0
    %744 = vmatprep.subr.mxu0 0.0
    %745 = vmatpush1.msra.mxu0 0.0
    %746 = vmatprep.subr.mxu0 0.0
    %747 = vmatpush1.msra.mxu0 0.0
    %748 = vmatprep.subr.mxu0 %v716
    %749 = vmatpush1.msra.mxu0 %v713
    %750 = vmatprep.subr.mxu0 0.0
    %751 = vmatpush2.msra.mxu0 0.0
    %752 = vmatprep.subr.mxu0 0.0
    %753 = vmatpush2.msra.mxu0 0.0
    %754 = vmatprep.subr.mxu0 0.0
    %755 = vmatpush2.msra.mxu0 0.0
    %756 = vmatprep.subr.mxu0 0.0
    %757 = vmatpush2.msra.mxu0 0.0
    %758 = vmatprep.subr.mxu0 0.0
    %759 = vmatpush2.msra.mxu0 0.0
    %760 = vmatprep.subr.mxu0 0.0
    %761 = vmatpush2.msra.mxu0 0.0
    %762 = vmatprep.subr.mxu0 0.0
    %763 = vmatpush2.msra.mxu0 0.0
    %764 = vmatprep.subr.mxu0 0.0
    %765 = vmatpush2.msra.mxu0 0.0
    %766 = vmatprep.subr.mxu0 0.0
    %767 = vmatpush2.msra.mxu0 0.0
    %768 = vmatprep.subr.mxu0 0.0
    %769 = vmatpush2.msra.mxu0 0.0
    %770 = vmatprep.subr.mxu0 0.0
    %771 = vmatpush2.msra.mxu0 0.0
    %772 = vmatprep.subr.mxu0 0.0
    %773 = vmatpush2.msra.mxu0 0.0
    %774 = vmatprep.subr.mxu0 0.0
    %775 = vmatpush2.msra.mxu0 0.0
    %776 = vmatprep.subr.mxu0 0.0
    %777 = vmatpush2.msra.mxu0 0.0
    %778 = vmatprep.subr.mxu0 0.0
    %779 = vmatpush2.msra.mxu0 0.0
    %780 = vmatprep.subr.mxu0 0.0
    %781 = vmatpush2.msra.mxu0 0.0
    %782 = vmatprep.mubr.f32.mxu0 0.0
    %783 = vmatmul.mubr.f32.gmra.mxu0 %v633
    %v784 = vpop.f32.mrf.mxu0
    %v785 = vadd.f32 0.0, %v784
    %v786 = vpop.f32.mrf.mxu0
    %v787 = vadd.f32 0.0, %v786
    %788 = vdwg.mxu0
    %v789 = vadd.f32 %v600, %v708
    %v790 = vadd.f32 %v601, %v710
    %v791 = vadd.f32 %v602, %v785
    %v792 = vadd.f32 %v603, %v787
    %v794 = vlaneseq
    %v795 = vshrl.u32 %v794, 7
    %v796 = vsub.s32 0, %v795
    %v797 = vrot.slane %v21, %v796
    %v798 = vlaneseq
    %v799 = vshrl.u32 %v798, 7
    %v800 = vsub.s32 1, %v799
    %v801 = vrot.slane %v21, %v800
    %v802 = vcombine.low %v797, %v801
    %v804 = vmul.f32 %v15, %v802
    %v805 = vmul.f32 %v16, %v802
    %v807 = vcombine.high %v804, %v804
    %v809 = vsel %vm99, %v30, 0
    %v811 = vsel %vm103, %v804, 0
    %v813 = vsel %vm103, %v807, 0
    %815 = vmatprep.subr.mxu0 0.0
    %816 = vmatpush1.msra.mxu0 0.0
    %817 = vmatprep.subr.mxu0 0.0
    %818 = vmatpush1.msra.mxu0 0.0
    %819 = vmatprep.subr.mxu0 0.0
    %820 = vmatpush1.msra.mxu0 0.0
    %821 = vmatprep.subr.mxu0 0.0
    %822 = vmatpush1.msra.mxu0 0.0
    %823 = vmatprep.subr.mxu0 0.0
    %824 = vmatpush1.msra.mxu0 0.0
    %825 = vmatprep.subr.mxu0 0.0
    %826 = vmatpush1.msra.mxu0 0.0
    %827 = vmatprep.subr.mxu0 0.0
    %828 = vmatpush1.msra.mxu0 0.0
    %829 = vmatprep.subr.mxu0 0.0
    %830 = vmatpush1.msra.mxu0 0.0
    %831 = vmatprep.subr.mxu0 0.0
    %832 = vmatpush1.msra.mxu0 0.0
    %833 = vmatprep.subr.mxu0 0.0
    %834 = vmatpush1.msra.mxu0 0.0
    %835 = vmatprep.subr.mxu0 0.0
    %836 = vmatpush1.msra.mxu0 0.0
    %837 = vmatprep.subr.mxu0 0.0
    %838 = vmatpush1.msra.mxu0 0.0
    %839 = vmatprep.subr.mxu0 0.0
    %840 = vmatpush1.msra.mxu0 0.0
    %841 = vmatprep.subr.mxu0 0.0
    %842 = vmatpush1.msra.mxu0 0.0
    %843 = vmatprep.subr.mxu0 0.0
    %844 = vmatpush1.msra.mxu0 0.0
    %845 = vmatprep.subr.mxu0 %v813
    %846 = vmatpush1.msra.mxu0 %v811
    %847 = vmatprep.subr.mxu0 0.0
    %848 = vmatpush2.msra.mxu0 0.0
    %849 = vmatprep.subr.mxu0 0.0
    %850 = vmatpush2.msra.mxu0 0.0
    %851 = vmatprep.subr.mxu0 0.0
    %852 = vmatpush2.msra.mxu0 0.0
    %853 = vmatprep.subr.mxu0 0.0
    %854 = vmatpush2.msra.mxu0 0.0
    %855 = vmatprep.subr.mxu0 0.0
    %856 = vmatpush2.msra.mxu0 0.0
    %857 = vmatprep.subr.mxu0 0.0
    %858 = vmatpush2.msra.mxu0 0.0
    %859 = vmatprep.subr.mxu0 0.0
    %860 = vmatpush2.msra.mxu0 0.0
    %861 = vmatprep.subr.mxu0 0.0
    %862 = vmatpush2.msra.mxu0 0.0
    %863 = vmatprep.subr.mxu0 0.0
    %864 = vmatpush2.msra.mxu0 0.0
    %865 = vmatprep.subr.mxu0 0.0
    %866 = vmatpush2.msra.mxu0 0.0
    %867 = vmatprep.subr.mxu0 0.0
    %868 = vmatpush2.msra.mxu0 0.0
    %869 = vmatprep.subr.mxu0 0.0
    %870 = vmatpush2.msra.mxu0 0.0
    %871 = vmatprep.subr.mxu0 0.0
    %872 = vmatpush2.msra.mxu0 0.0
    %873 = vmatprep.subr.mxu0 0.0
    %874 = vmatpush2.msra.mxu0 0.0
    %875 = vmatprep.subr.mxu0 0.0
    %876 = vmatpush2.msra.mxu0 0.0
    %877 = vmatprep.subr.mxu0 0.0
    %878 = vmatpush2.msra.mxu0 0.0
    %879 = vmatprep.mubr.f32.mxu0 0.0
    %880 = vmatmul.mubr.f32.gmra.mxu0 %v809
    %v881 = vpop.f32.mrf.mxu0
    %v882 = vadd.f32 0.0, %v881
    %v883 = vpop.f32.mrf.mxu0
    %v884 = vadd.f32 0.0, %v883
    %885 = vdwg.mxu0
    %v887 = vcombine.high %v805, %v805
    %v888 = vsel %vm103, %v805, 0
    %v890 = vsel %vm103, %v887, 0
    %892 = vmatprep.subr.mxu0 0.0
    %893 = vmatpush1.msra.mxu0 0.0
    %894 = vmatprep.subr.mxu0 0.0
    %895 = vmatpush1.msra.mxu0 0.0
    %896 = vmatprep.subr.mxu0 0.0
    %897 = vmatpush1.msra.mxu0 0.0
    %898 = vmatprep.subr.mxu0 0.0
    %899 = vmatpush1.msra.mxu0 0.0
    %900 = vmatprep.subr.mxu0 0.0
    %901 = vmatpush1.msra.mxu0 0.0
    %902 = vmatprep.subr.mxu0 0.0
    %903 = vmatpush1.msra.mxu0 0.0
    %904 = vmatprep.subr.mxu0 0.0
    %905 = vmatpush1.msra.mxu0 0.0
    %906 = vmatprep.subr.mxu0 0.0
    %907 = vmatpush1.msra.mxu0 0.0
    %908 = vmatprep.subr.mxu0 0.0
    %909 = vmatpush1.msra.mxu0 0.0
    %910 = vmatprep.subr.mxu0 0.0
    %911 = vmatpush1.msra.mxu0 0.0
    %912 = vmatprep.subr.mxu0 0.0
    %913 = vmatpush1.msra.mxu0 0.0
    %914 = vmatprep.subr.mxu0 0.0
    %915 = vmatpush1.msra.mxu0 0.0
    %916 = vmatprep.subr.mxu0 0.0
    %917 = vmatpush1.msra.mxu0 0.0
    %918 = vmatprep.subr.mxu0 0.0
    %919 = vmatpush1.msra.mxu0 0.0
    %920 = vmatprep.subr.mxu0 0.0
    %921 = vmatpush1.msra.mxu0 0.0
    %922 = vmatprep.subr.mxu0 %v890
    %923 = vmatpush1.msra.mxu0 %v888
    %924 = vmatprep.subr.mxu0 0.0
    %925 = vmatpush2.msra.mxu0 0.0
    %926 = vmatprep.subr.mxu0 0.0
    %927 = vmatpush2.msra.mxu0 0.0
    %928 = vmatprep.subr.mxu0 0.0
    %929 = vmatpush2.msra.mxu0 0.0
    %930 = vmatprep.subr.mxu0 0.0
    %931 = vmatpush2.msra.mxu0 0.0
    %932 = vmatprep.subr.mxu0 0.0
    %933 = vmatpush2.msra.mxu0 0.0
    %934 = vmatprep.subr.mxu0 0.0
    %935 = vmatpush2.msra.mxu0 0.0
    %936 = vmatprep.subr.mxu0 0.0
    %937 = vmatpush2.msra.mxu0 0.0
    %938 = vmatprep.subr.mxu0 0.0
    %939 = vmatpush2.msra.mxu0 0.0
    %940 = vmatprep.subr.mxu0 0.0
    %941 = vmatpush2.msra.mxu0 0.0
    %942 = vmatprep.subr.mxu0 0.0
    %943 = vmatpush2.msra.mxu0 0.0
    %944 = vmatprep.subr.mxu0 0.0
    %945 = vmatpush2.msra.mxu0 0.0
    %946 = vmatprep.subr.mxu0 0.0
    %947 = vmatpush2.msra.mxu0 0.0
    %948 = vmatprep.subr.mxu0 0.0
    %949 = vmatpush2.msra.mxu0 0.0
    %950 = vmatprep.subr.mxu0 0.0
    %951 = vmatpush2.msra.mxu0 0.0
    %952 = vmatprep.subr.mxu0 0.0
    %953 = vmatpush2.msra.mxu0 0.0
    %954 = vmatprep.subr.mxu0 0.0
    %955 = vmatpush2.msra.mxu0 0.0
    %956 = vmatprep.mubr.f32.mxu0 0.0
    %957 = vmatmul.mubr.f32.gmra.mxu0 %v809
    %v958 = vpop.f32.mrf.mxu0
    %v959 = vadd.f32 0.0, %v958
    %v960 = vpop.f32.mrf.mxu0
    %v961 = vadd.f32 0.0, %v960
    %962 = vdwg.mxu0
    %v963 = vadd.f32 %v789, %v882
    %v964 = vadd.f32 %v790, %v884
    %v965 = vadd.f32 %v791, %v959
    %v966 = vadd.f32 %v792, %v961
    %967 = vrot.lane.b32.xlu0 %v15, 127
    %v968 = vpop.permute.xlu0 %967
    %969 = vrot.lane.b32.xlu0 %v16, 127
    %v970 = vpop.permute.xlu0 %969
    %971 = vrot.lane.b32.xlu0 %v37, 127
    %v972 = vpop.permute.xlu0 %971
    %973 = vrot.lane.b32.xlu0 %v38, 127
    %v974 = vpop.permute.xlu0 %973
    %vm975 = vcmp.lt.s32.totalorder %v50, 127
    %v976 = vsel %vm975, %v968, %v972
    %v977 = vsel %vm975, %v970, %v974
    %v978 = vsel %vm975, %v972, %v968
    %v979 = vsel %vm975, %v974, %v970
    %v981 = vlaneseq
    %v982 = vshrl.u32 %v981, 7
    %v983 = vsub.s32 0, %v982
    %v984 = vrot.slane %v22, %v983
    %v985 = vlaneseq
    %v986 = vshrl.u32 %v985, 7
    %v987 = vsub.s32 1, %v986
    %v988 = vrot.slane %v22, %v987
    %v991 = vmul.f32 %v976, %v984
    %v992 = vmul.f32 %v978, %v988
    %v993 = vmul.f32 %v977, %v984
    %v994 = vmul.f32 %v979, %v988
    %v996 = vsel %vm99, %v31, 0
    %v999 = vsel %vm103, %v991, 0
    %v1002 = vsel %vm103, %v992, 0
    %1004 = vmatprep.subr.mxu0 0.0
    %1005 = vmatpush1.msra.mxu0 0.0
    %1006 = vmatprep.subr.mxu0 0.0
    %1007 = vmatpush1.msra.mxu0 0.0
    %1008 = vmatprep.subr.mxu0 0.0
    %1009 = vmatpush1.msra.mxu0 0.0
    %1010 = vmatprep.subr.mxu0 0.0
    %1011 = vmatpush1.msra.mxu0 0.0
    %1012 = vmatprep.subr.mxu0 0.0
    %1013 = vmatpush1.msra.mxu0 0.0
    %1014 = vmatprep.subr.mxu0 0.0
    %1015 = vmatpush1.msra.mxu0 0.0
    %1016 = vmatprep.subr.mxu0 0.0
    %1017 = vmatpush1.msra.mxu0 0.0
    %1018 = vmatprep.subr.mxu0 0.0
    %1019 = vmatpush1.msra.mxu0 0.0
    %1020 = vmatprep.subr.mxu0 0.0
    %1021 = vmatpush1.msra.mxu0 0.0
    %1022 = vmatprep.subr.mxu0 0.0
    %1023 = vmatpush1.msra.mxu0 0.0
    %1024 = vmatprep.subr.mxu0 0.0
    %1025 = vmatpush1.msra.mxu0 0.0
    %1026 = vmatprep.subr.mxu0 0.0
    %1027 = vmatpush1.msra.mxu0 0.0
    %1028 = vmatprep.subr.mxu0 0.0
    %1029 = vmatpush1.msra.mxu0 0.0
    %1030 = vmatprep.subr.mxu0 0.0
    %1031 = vmatpush1.msra.mxu0 0.0
    %1032 = vmatprep.subr.mxu0 0.0
    %1033 = vmatpush1.msra.mxu0 0.0
    %1034 = vmatprep.subr.mxu0 %v1002
    %1035 = vmatpush1.msra.mxu0 %v999
    %1036 = vmatprep.subr.mxu0 0.0
    %1037 = vmatpush2.msra.mxu0 0.0
    %1038 = vmatprep.subr.mxu0 0.0
    %1039 = vmatpush2.msra.mxu0 0.0
    %1040 = vmatprep.subr.mxu0 0.0
    %1041 = vmatpush2.msra.mxu0 0.0
    %1042 = vmatprep.subr.mxu0 0.0
    %1043 = vmatpush2.msra.mxu0 0.0
    %1044 = vmatprep.subr.mxu0 0.0
    %1045 = vmatpush2.msra.mxu0 0.0
    %1046 = vmatprep.subr.mxu0 0.0
    %1047 = vmatpush2.msra.mxu0 0.0
    %1048 = vmatprep.subr.mxu0 0.0
    %1049 = vmatpush2.msra.mxu0 0.0
    %1050 = vmatprep.subr.mxu0 0.0
    %1051 = vmatpush2.msra.mxu0 0.0
    %1052 = vmatprep.subr.mxu0 0.0
    %1053 = vmatpush2.msra.mxu0 0.0
    %1054 = vmatprep.subr.mxu0 0.0
    %1055 = vmatpush2.msra.mxu0 0.0
    %1056 = vmatprep.subr.mxu0 0.0
    %1057 = vmatpush2.msra.mxu0 0.0
    %1058 = vmatprep.subr.mxu0 0.0
    %1059 = vmatpush2.msra.mxu0 0.0
    %1060 = vmatprep.subr.mxu0 0.0
    %1061 = vmatpush2.msra.mxu0 0.0
    %1062 = vmatprep.subr.mxu0 0.0
    %1063 = vmatpush2.msra.mxu0 0.0
    %1064 = vmatprep.subr.mxu0 0.0
    %1065 = vmatpush2.msra.mxu0 0.0
    %1066 = vmatprep.subr.mxu0 0.0
    %1067 = vmatpush2.msra.mxu0 0.0
    %1068 = vmatprep.mubr.f32.mxu0 0.0
    %1069 = vmatmul.mubr.f32.gmra.mxu0 %v996
    %v1070 = vpop.f32.mrf.mxu0
    %v1071 = vadd.f32 0.0, %v1070
    %v1072 = vpop.f32.mrf.mxu0
    %v1073 = vadd.f32 0.0, %v1072
    %1074 = vdwg.mxu0
    %v1076 = vsel %vm103, %v993, 0
    %v1079 = vsel %vm103, %v994, 0
    %1081 = vmatprep.subr.mxu0 0.0
    %1082 = vmatpush1.msra.mxu0 0.0
    %1083 = vmatprep.subr.mxu0 0.0
    %1084 = vmatpush1.msra.mxu0 0.0
    %1085 = vmatprep.subr.mxu0 0.0
    %1086 = vmatpush1.msra.mxu0 0.0
    %1087 = vmatprep.subr.mxu0 0.0
    %1088 = vmatpush1.msra.mxu0 0.0
    %1089 = vmatprep.subr.mxu0 0.0
    %1090 = vmatpush1.msra.mxu0 0.0
    %1091 = vmatprep.subr.mxu0 0.0
    %1092 = vmatpush1.msra.mxu0 0.0
    %1093 = vmatprep.subr.mxu0 0.0
    %1094 = vmatpush1.msra.mxu0 0.0
    %1095 = vmatprep.subr.mxu0 0.0
    %1096 = vmatpush1.msra.mxu0 0.0
    %1097 = vmatprep.subr.mxu0 0.0
    %1098 = vmatpush1.msra.mxu0 0.0
    %1099 = vmatprep.subr.mxu0 0.0
    %1100 = vmatpush1.msra.mxu0 0.0
    %1101 = vmatprep.subr.mxu0 0.0
    %1102 = vmatpush1.msra.mxu0 0.0
    %1103 = vmatprep.subr.mxu0 0.0
    %1104 = vmatpush1.msra.mxu0 0.0
    %1105 = vmatprep.subr.mxu0 0.0
    %1106 = vmatpush1.msra.mxu0 0.0
    %1107 = vmatprep.subr.mxu0 0.0
    %1108 = vmatpush1.msra.mxu0 0.0
    %1109 = vmatprep.subr.mxu0 0.0
    %1110 = vmatpush1.msra.mxu0 0.0
    %1111 = vmatprep.subr.mxu0 %v1079
    %1112 = vmatpush1.msra.mxu0 %v1076
    %1113 = vmatprep.subr.mxu0 0.0
    %1114 = vmatpush2.msra.mxu0 0.0
    %1115 = vmatprep.subr.mxu0 0.0
    %1116 = vmatpush2.msra.mxu0 0.0
    %1117 = vmatprep.subr.mxu0 0.0
    %1118 = vmatpush2.msra.mxu0 0.0
    %1119 = vmatprep.subr.mxu0 0.0
    %1120 = vmatpush2.msra.mxu0 0.0
    %1121 = vmatprep.subr.mxu0 0.0
    %1122 = vmatpush2.msra.mxu0 0.0
    %1123 = vmatprep.subr.mxu0 0.0
    %1124 = vmatpush2.msra.mxu0 0.0
    %1125 = vmatprep.subr.mxu0 0.0
    %1126 = vmatpush2.msra.mxu0 0.0
    %1127 = vmatprep.subr.mxu0 0.0
    %1128 = vmatpush2.msra.mxu0 0.0
    %1129 = vmatprep.subr.mxu0 0.0
    %1130 = vmatpush2.msra.mxu0 0.0
    %1131 = vmatprep.subr.mxu0 0.0
    %1132 = vmatpush2.msra.mxu0 0.0
    %1133 = vmatprep.subr.mxu0 0.0
    %1134 = vmatpush2.msra.mxu0 0.0
    %1135 = vmatprep.subr.mxu0 0.0
    %1136 = vmatpush2.msra.mxu0 0.0
    %1137 = vmatprep.subr.mxu0 0.0
    %1138 = vmatpush2.msra.mxu0 0.0
    %1139 = vmatprep.subr.mxu0 0.0
    %1140 = vmatpush2.msra.mxu0 0.0
    %1141 = vmatprep.subr.mxu0 0.0
    %1142 = vmatpush2.msra.mxu0 0.0
    %1143 = vmatprep.subr.mxu0 0.0
    %1144 = vmatpush2.msra.mxu0 0.0
    %1145 = vmatprep.mubr.f32.mxu0 0.0
    %1146 = vmatmul.mubr.f32.gmra.mxu0 %v996
    %v1147 = vpop.f32.mrf.mxu0
    %v1148 = vadd.f32 0.0, %v1147
    %v1149 = vpop.f32.mrf.mxu0
    %v1150 = vadd.f32 0.0, %v1149
    %1151 = vdwg.mxu0
    %v1152 = vadd.f32 %v963, %v1071
    %v1153 = vadd.f32 %v964, %v1073
    %v1154 = vadd.f32 %v965, %v1148
    %v1155 = vadd.f32 %v966, %v1150
    %1156 = vrot.lane.b32.xlu0 %v15, 113
    %v1157 = vpop.permute.xlu0 %1156
    %1158 = vrot.lane.b32.xlu0 %v16, 113
    %v1159 = vpop.permute.xlu0 %1158
    %1160 = vrot.lane.b32.xlu0 %v37, 113
    %v1161 = vpop.permute.xlu0 %1160
    %1162 = vrot.lane.b32.xlu0 %v38, 113
    %v1163 = vpop.permute.xlu0 %1162
    %vm1164 = vcmp.lt.s32.totalorder %v50, 113
    %v1165 = vsel %vm1164, %v1157, %v1161
    %v1166 = vsel %vm1164, %v1159, %v1163
    %v1167 = vsel %vm1164, %v1161, %v1157
    %v1168 = vsel %vm1164, %v1163, %v1159
    %v1170 = vlaneseq
    %v1171 = vshrl.u32 %v1170, 7
    %v1172 = vsub.s32 0, %v1171
    %v1173 = vrot.slane %v23, %v1172
    %v1174 = vlaneseq
    %v1175 = vshrl.u32 %v1174, 7
    %v1176 = vsub.s32 1, %v1175
    %v1177 = vrot.slane %v23, %v1176
    %v1180 = vmul.f32 %v1165, %v1173
    %v1181 = vmul.f32 %v1167, %v1177
    %v1182 = vmul.f32 %v1166, %v1173
    %v1183 = vmul.f32 %v1168, %v1177
    %v1185 = vsel %vm99, %v32, 0
    %v1188 = vsel %vm103, %v1180, 0
    %v1191 = vsel %vm103, %v1181, 0
    %1193 = vmatprep.subr.mxu0 0.0
    %1194 = vmatpush1.msra.mxu0 0.0
    %1195 = vmatprep.subr.mxu0 0.0
    %1196 = vmatpush1.msra.mxu0 0.0
    %1197 = vmatprep.subr.mxu0 0.0
    %1198 = vmatpush1.msra.mxu0 0.0
    %1199 = vmatprep.subr.mxu0 0.0
    %1200 = vmatpush1.msra.mxu0 0.0
    %1201 = vmatprep.subr.mxu0 0.0
    %1202 = vmatpush1.msra.mxu0 0.0
    %1203 = vmatprep.subr.mxu0 0.0
    %1204 = vmatpush1.msra.mxu0 0.0
    %1205 = vmatprep.subr.mxu0 0.0
    %1206 = vmatpush1.msra.mxu0 0.0
    %1207 = vmatprep.subr.mxu0 0.0
    %1208 = vmatpush1.msra.mxu0 0.0
    %1209 = vmatprep.subr.mxu0 0.0
    %1210 = vmatpush1.msra.mxu0 0.0
    %1211 = vmatprep.subr.mxu0 0.0
    %1212 = vmatpush1.msra.mxu0 0.0
    %1213 = vmatprep.subr.mxu0 0.0
    %1214 = vmatpush1.msra.mxu0 0.0
    %1215 = vmatprep.subr.mxu0 0.0
    %1216 = vmatpush1.msra.mxu0 0.0
    %1217 = vmatprep.subr.mxu0 0.0
    %1218 = vmatpush1.msra.mxu0 0.0
    %1219 = vmatprep.subr.mxu0 0.0
    %1220 = vmatpush1.msra.mxu0 0.0
    %1221 = vmatprep.subr.mxu0 0.0
    %1222 = vmatpush1.msra.mxu0 0.0
    %1223 = vmatprep.subr.mxu0 %v1191
    %1224 = vmatpush1.msra.mxu0 %v1188
    %1225 = vmatprep.subr.mxu0 0.0
    %1226 = vmatpush2.msra.mxu0 0.0
    %1227 = vmatprep.subr.mxu0 0.0
    %1228 = vmatpush2.msra.mxu0 0.0
    %1229 = vmatprep.subr.mxu0 0.0
    %1230 = vmatpush2.msra.mxu0 0.0
    %1231 = vmatprep.subr.mxu0 0.0
    %1232 = vmatpush2.msra.mxu0 0.0
    %1233 = vmatprep.subr.mxu0 0.0
    %1234 = vmatpush2.msra.mxu0 0.0
    %1235 = vmatprep.subr.mxu0 0.0
    %1236 = vmatpush2.msra.mxu0 0.0
    %1237 = vmatprep.subr.mxu0 0.0
    %1238 = vmatpush2.msra.mxu0 0.0
    %1239 = vmatprep.subr.mxu0 0.0
    %1240 = vmatpush2.msra.mxu0 0.0
    %1241 = vmatprep.subr.mxu0 0.0
    %1242 = vmatpush2.msra.mxu0 0.0
    %1243 = vmatprep.subr.mxu0 0.0
    %1244 = vmatpush2.msra.mxu0 0.0
    %1245 = vmatprep.subr.mxu0 0.0
    %1246 = vmatpush2.msra.mxu0 0.0
    %1247 = vmatprep.subr.mxu0 0.0
    %1248 = vmatpush2.msra.mxu0 0.0
    %1249 = vmatprep.subr.mxu0 0.0
    %1250 = vmatpush2.msra.mxu0 0.0
    %1251 = vmatprep.subr.mxu0 0.0
    %1252 = vmatpush2.msra.mxu0 0.0
    %1253 = vmatprep.subr.mxu0 0.0
    %1254 = vmatpush2.msra.mxu0 0.0
    %1255 = vmatprep.subr.mxu0 0.0
    %1256 = vmatpush2.msra.mxu0 0.0
    %1257 = vmatprep.mubr.f32.mxu0 0.0
    %1258 = vmatmul.mubr.f32.gmra.mxu0 %v1185
    %v1259 = vpop.f32.mrf.mxu0
    %v1260 = vadd.f32 0.0, %v1259
    %v1261 = vpop.f32.mrf.mxu0
    %v1262 = vadd.f32 0.0, %v1261
    %1263 = vdwg.mxu0
    %v1265 = vsel %vm103, %v1182, 0
    %v1268 = vsel %vm103, %v1183, 0
    %1270 = vmatprep.subr.mxu0 0.0
    %1271 = vmatpush1.msra.mxu0 0.0
    %1272 = vmatprep.subr.mxu0 0.0
    %1273 = vmatpush1.msra.mxu0 0.0
    %1274 = vmatprep.subr.mxu0 0.0
    %1275 = vmatpush1.msra.mxu0 0.0
    %1276 = vmatprep.subr.mxu0 0.0
    %1277 = vmatpush1.msra.mxu0 0.0
    %1278 = vmatprep.subr.mxu0 0.0
    %1279 = vmatpush1.msra.mxu0 0.0
    %1280 = vmatprep.subr.mxu0 0.0
    %1281 = vmatpush1.msra.mxu0 0.0
    %1282 = vmatprep.subr.mxu0 0.0
    %1283 = vmatpush1.msra.mxu0 0.0
    %1284 = vmatprep.subr.mxu0 0.0
    %1285 = vmatpush1.msra.mxu0 0.0
    %1286 = vmatprep.subr.mxu0 0.0
    %1287 = vmatpush1.msra.mxu0 0.0
    %1288 = vmatprep.subr.mxu0 0.0
    %1289 = vmatpush1.msra.mxu0 0.0
    %1290 = vmatprep.subr.mxu0 0.0
    %1291 = vmatpush1.msra.mxu0 0.0
    %1292 = vmatprep.subr.mxu0 0.0
    %1293 = vmatpush1.msra.mxu0 0.0
    %1294 = vmatprep.subr.mxu0 0.0
    %1295 = vmatpush1.msra.mxu0 0.0
    %1296 = vmatprep.subr.mxu0 0.0
    %1297 = vmatpush1.msra.mxu0 0.0
    %1298 = vmatprep.subr.mxu0 0.0
    %1299 = vmatpush1.msra.mxu0 0.0
    %1300 = vmatprep.subr.mxu0 %v1268
    %1301 = vmatpush1.msra.mxu0 %v1265
    %1302 = vmatprep.subr.mxu0 0.0
    %1303 = vmatpush2.msra.mxu0 0.0
    %1304 = vmatprep.subr.mxu0 0.0
    %1305 = vmatpush2.msra.mxu0 0.0
    %1306 = vmatprep.subr.mxu0 0.0
    %1307 = vmatpush2.msra.mxu0 0.0
    %1308 = vmatprep.subr.mxu0 0.0
    %1309 = vmatpush2.msra.mxu0 0.0
    %1310 = vmatprep.subr.mxu0 0.0
    %1311 = vmatpush2.msra.mxu0 0.0
    %1312 = vmatprep.subr.mxu0 0.0
    %1313 = vmatpush2.msra.mxu0 0.0
    %1314 = vmatprep.subr.mxu0 0.0
    %1315 = vmatpush2.msra.mxu0 0.0
    %1316 = vmatprep.subr.mxu0 0.0
    %1317 = vmatpush2.msra.mxu0 0.0
    %1318 = vmatprep.subr.mxu0 0.0
    %1319 = vmatpush2.msra.mxu0 0.0
    %1320 = vmatprep.subr.mxu0 0.0
    %1321 = vmatpush2.msra.mxu0 0.0
    %1322 = vmatprep.subr.mxu0 0.0
    %1323 = vmatpush2.msra.mxu0 0.0
    %1324 = vmatprep.subr.mxu0 0.0
    %1325 = vmatpush2.msra.mxu0 0.0
    %1326 = vmatprep.subr.mxu0 0.0
    %1327 = vmatpush2.msra.mxu0 0.0
    %1328 = vmatprep.subr.mxu0 0.0
    %1329 = vmatpush2.msra.mxu0 0.0
    %1330 = vmatprep.subr.mxu0 0.0
    %1331 = vmatpush2.msra.mxu0 0.0
    %1332 = vmatprep.subr.mxu0 0.0
    %1333 = vmatpush2.msra.mxu0 0.0
    %1334 = vmatprep.mubr.f32.mxu0 0.0
    %1335 = vmatmul.mubr.f32.gmra.mxu0 %v1185
    %v1336 = vpop.f32.mrf.mxu0
    %v1337 = vadd.f32 0.0, %v1336
    %v1338 = vpop.f32.mrf.mxu0
    %v1339 = vadd.f32 0.0, %v1338
    %1340 = vdwg.mxu0
    %v1341 = vadd.f32 %v1152, %v1260
    %v1342 = vadd.f32 %v1153, %v1262
    %v1343 = vadd.f32 %v1154, %v1337
    %v1344 = vadd.f32 %v1155, %v1339
    %1345 = vrot.lane.b32.xlu0 %v15, 112
    %v1346 = vpop.permute.xlu0 %1345
    %1347 = vrot.lane.b32.xlu0 %v16, 112
    %v1348 = vpop.permute.xlu0 %1347
    %1349 = vrot.lane.b32.xlu0 %v37, 112
    %v1350 = vpop.permute.xlu0 %1349
    %1351 = vrot.lane.b32.xlu0 %v38, 112
    %v1352 = vpop.permute.xlu0 %1351
    %vm1353 = vcmp.lt.s32.totalorder %v50, 112
    %v1354 = vsel %vm1353, %v1346, %v1350
    %v1355 = vsel %vm1353, %v1348, %v1352
    %v1356 = vsel %vm1353, %v1350, %v1346
    %v1357 = vsel %vm1353, %v1352, %v1348
    %v1359 = vlaneseq
    %v1360 = vshrl.u32 %v1359, 7
    %v1361 = vsub.s32 0, %v1360
    %v1362 = vrot.slane %v24, %v1361
    %v1363 = vlaneseq
    %v1364 = vshrl.u32 %v1363, 7
    %v1365 = vsub.s32 1, %v1364
    %v1366 = vrot.slane %v24, %v1365
    %v1369 = vmul.f32 %v1354, %v1362
    %v1370 = vmul.f32 %v1356, %v1366
    %v1371 = vmul.f32 %v1355, %v1362
    %v1372 = vmul.f32 %v1357, %v1366
    %v1374 = vsel %vm99, %v33, 0
    %v1377 = vsel %vm103, %v1369, 0
    %v1380 = vsel %vm103, %v1370, 0
    %1382 = vmatprep.subr.mxu0 0.0
    %1383 = vmatpush1.msra.mxu0 0.0
    %1384 = vmatprep.subr.mxu0 0.0
    %1385 = vmatpush1.msra.mxu0 0.0
    %1386 = vmatprep.subr.mxu0 0.0
    %1387 = vmatpush1.msra.mxu0 0.0
    %1388 = vmatprep.subr.mxu0 0.0
    %1389 = vmatpush1.msra.mxu0 0.0
    %1390 = vmatprep.subr.mxu0 0.0
    %1391 = vmatpush1.msra.mxu0 0.0
    %1392 = vmatprep.subr.mxu0 0.0
    %1393 = vmatpush1.msra.mxu0 0.0
    %1394 = vmatprep.subr.mxu0 0.0
    %1395 = vmatpush1.msra.mxu0 0.0
    %1396 = vmatprep.subr.mxu0 0.0
    %1397 = vmatpush1.msra.mxu0 0.0
    %1398 = vmatprep.subr.mxu0 0.0
    %1399 = vmatpush1.msra.mxu0 0.0
    %1400 = vmatprep.subr.mxu0 0.0
    %1401 = vmatpush1.msra.mxu0 0.0
    %1402 = vmatprep.subr.mxu0 0.0
    %1403 = vmatpush1.msra.mxu0 0.0
    %1404 = vmatprep.subr.mxu0 0.0
    %1405 = vmatpush1.msra.mxu0 0.0
    %1406 = vmatprep.subr.mxu0 0.0
    %1407 = vmatpush1.msra.mxu0 0.0
    %1408 = vmatprep.subr.mxu0 0.0
    %1409 = vmatpush1.msra.mxu0 0.0
    %1410 = vmatprep.subr.mxu0 0.0
    %1411 = vmatpush1.msra.mxu0 0.0
    %1412 = vmatprep.subr.mxu0 %v1380
    %1413 = vmatpush1.msra.mxu0 %v1377
    %1414 = vmatprep.subr.mxu0 0.0
    %1415 = vmatpush2.msra.mxu0 0.0
    %1416 = vmatprep.subr.mxu0 0.0
    %1417 = vmatpush2.msra.mxu0 0.0
    %1418 = vmatprep.subr.mxu0 0.0
    %1419 = vmatpush2.msra.mxu0 0.0
    %1420 = vmatprep.subr.mxu0 0.0
    %1421 = vmatpush2.msra.mxu0 0.0
    %1422 = vmatprep.subr.mxu0 0.0
    %1423 = vmatpush2.msra.mxu0 0.0
    %1424 = vmatprep.subr.mxu0 0.0
    %1425 = vmatpush2.msra.mxu0 0.0
    %1426 = vmatprep.subr.mxu0 0.0
    %1427 = vmatpush2.msra.mxu0 0.0
    %1428 = vmatprep.subr.mxu0 0.0
    %1429 = vmatpush2.msra.mxu0 0.0
    %1430 = vmatprep.subr.mxu0 0.0
    %1431 = vmatpush2.msra.mxu0 0.0
    %1432 = vmatprep.subr.mxu0 0.0
    %1433 = vmatpush2.msra.mxu0 0.0
    %1434 = vmatprep.subr.mxu0 0.0
    %1435 = vmatpush2.msra.mxu0 0.0
    %1436 = vmatprep.subr.mxu0 0.0
    %1437 = vmatpush2.msra.mxu0 0.0
    %1438 = vmatprep.subr.mxu0 0.0
    %1439 = vmatpush2.msra.mxu0 0.0
    %1440 = vmatprep.subr.mxu0 0.0
    %1441 = vmatpush2.msra.mxu0 0.0
    %1442 = vmatprep.subr.mxu0 0.0
    %1443 = vmatpush2.msra.mxu0 0.0
    %1444 = vmatprep.subr.mxu0 0.0
    %1445 = vmatpush2.msra.mxu0 0.0
    %1446 = vmatprep.mubr.f32.mxu0 0.0
    %1447 = vmatmul.mubr.f32.gmra.mxu0 %v1374
    %v1448 = vpop.f32.mrf.mxu0
    %v1449 = vadd.f32 0.0, %v1448
    %v1450 = vpop.f32.mrf.mxu0
    %v1451 = vadd.f32 0.0, %v1450
    %1452 = vdwg.mxu0
    %v1454 = vsel %vm103, %v1371, 0
    %v1457 = vsel %vm103, %v1372, 0
    %1459 = vmatprep.subr.mxu0 0.0
    %1460 = vmatpush1.msra.mxu0 0.0
    %1461 = vmatprep.subr.mxu0 0.0
    %1462 = vmatpush1.msra.mxu0 0.0
    %1463 = vmatprep.subr.mxu0 0.0
    %1464 = vmatpush1.msra.mxu0 0.0
    %1465 = vmatprep.subr.mxu0 0.0
    %1466 = vmatpush1.msra.mxu0 0.0
    %1467 = vmatprep.subr.mxu0 0.0
    %1468 = vmatpush1.msra.mxu0 0.0
    %1469 = vmatprep.subr.mxu0 0.0
    %1470 = vmatpush1.msra.mxu0 0.0
    %1471 = vmatprep.subr.mxu0 0.0
    %1472 = vmatpush1.msra.mxu0 0.0
    %1473 = vmatprep.subr.mxu0 0.0
    %1474 = vmatpush1.msra.mxu0 0.0
    %1475 = vmatprep.subr.mxu0 0.0
    %1476 = vmatpush1.msra.mxu0 0.0
    %1477 = vmatprep.subr.mxu0 0.0
    %1478 = vmatpush1.msra.mxu0 0.0
    %1479 = vmatprep.subr.mxu0 0.0
    %1480 = vmatpush1.msra.mxu0 0.0
    %1481 = vmatprep.subr.mxu0 0.0
    %1482 = vmatpush1.msra.mxu0 0.0
    %1483 = vmatprep.subr.mxu0 0.0
    %1484 = vmatpush1.msra.mxu0 0.0
    %1485 = vmatprep.subr.mxu0 0.0
    %1486 = vmatpush1.msra.mxu0 0.0
    %1487 = vmatprep.subr.mxu0 0.0
    %1488 = vmatpush1.msra.mxu0 0.0
    %1489 = vmatprep.subr.mxu0 %v1457
    %1490 = vmatpush1.msra.mxu0 %v1454
    %1491 = vmatprep.subr.mxu0 0.0
    %1492 = vmatpush2.msra.mxu0 0.0
    %1493 = vmatprep.subr.mxu0 0.0
    %1494 = vmatpush2.msra.mxu0 0.0
    %1495 = vmatprep.subr.mxu0 0.0
    %1496 = vmatpush2.msra.mxu0 0.0
    %1497 = vmatprep.subr.mxu0 0.0
    %1498 = vmatpush2.msra.mxu0 0.0
    %1499 = vmatprep.subr.mxu0 0.0
    %1500 = vmatpush2.msra.mxu0 0.0
    %1501 = vmatprep.subr.mxu0 0.0
    %1502 = vmatpush2.msra.mxu0 0.0
    %1503 = vmatprep.subr.mxu0 0.0
    %1504 = vmatpush2.msra.mxu0 0.0
    %1505 = vmatprep.subr.mxu0 0.0
    %1506 = vmatpush2.msra.mxu0 0.0
    %1507 = vmatprep.subr.mxu0 0.0
    %1508 = vmatpush2.msra.mxu0 0.0
    %1509 = vmatprep.subr.mxu0 0.0
    %1510 = vmatpush2.msra.mxu0 0.0
    %1511 = vmatprep.subr.mxu0 0.0
    %1512 = vmatpush2.msra.mxu0 0.0
    %1513 = vmatprep.subr.mxu0 0.0
    %1514 = vmatpush2.msra.mxu0 0.0
    %1515 = vmatprep.subr.mxu0 0.0
    %1516 = vmatpush2.msra.mxu0 0.0
    %1517 = vmatprep.subr.mxu0 0.0
    %1518 = vmatpush2.msra.mxu0 0.0
    %1519 = vmatprep.subr.mxu0 0.0
    %1520 = vmatpush2.msra.mxu0 0.0
    %1521 = vmatprep.subr.mxu0 0.0
    %1522 = vmatpush2.msra.mxu0 0.0
    %1523 = vmatprep.mubr.f32.mxu0 0.0
    %1524 = vmatmul.mubr.f32.gmra.mxu0 %v1374
    %v1525 = vpop.f32.mrf.mxu0
    %v1526 = vadd.f32 0.0, %v1525
    %v1527 = vpop.f32.mrf.mxu0
    %v1528 = vadd.f32 0.0, %v1527
    %1529 = vdwg.mxu0
    %v1530 = vadd.f32 %v1341, %v1449
    %v1531 = vadd.f32 %v1342, %v1451
    %v1532 = vadd.f32 %v1343, %v1526
    %v1533 = vadd.f32 %v1344, %v1528
    %1534 = vrot.lane.b32.xlu0 %v15, 111
    %v1535 = vpop.permute.xlu0 %1534
    %1536 = vrot.lane.b32.xlu0 %v16, 111
    %v1537 = vpop.permute.xlu0 %1536
    %1538 = vrot.lane.b32.xlu0 %v37, 111
    %v1539 = vpop.permute.xlu0 %1538
    %1540 = vrot.lane.b32.xlu0 %v38, 111
    %v1541 = vpop.permute.xlu0 %1540
    %vm1542 = vcmp.lt.s32.totalorder %v50, 111
    %v1543 = vsel %vm1542, %v1535, %v1539
    %v1544 = vsel %vm1542, %v1537, %v1541
    %v1545 = vsel %vm1542, %v1539, %v1535
    %v1546 = vsel %vm1542, %v1541, %v1537
    %v1548 = vlaneseq
    %v1549 = vshrl.u32 %v1548, 7
    %v1550 = vsub.s32 0, %v1549
    %v1551 = vrot.slane %v25, %v1550
    %v1552 = vlaneseq
    %v1553 = vshrl.u32 %v1552, 7
    %v1554 = vsub.s32 1, %v1553
    %v1555 = vrot.slane %v25, %v1554
    %v1558 = vmul.f32 %v1543, %v1551
    %v1559 = vmul.f32 %v1545, %v1555
    %v1560 = vmul.f32 %v1544, %v1551
    %v1561 = vmul.f32 %v1546, %v1555
    %v1563 = vsel %vm99, %v34, 0
    %v1566 = vsel %vm103, %v1558, 0
    %v1569 = vsel %vm103, %v1559, 0
    %1571 = vmatprep.subr.mxu0 0.0
    %1572 = vmatpush1.msra.mxu0 0.0
    %1573 = vmatprep.subr.mxu0 0.0
    %1574 = vmatpush1.msra.mxu0 0.0
    %1575 = vmatprep.subr.mxu0 0.0
    %1576 = vmatpush1.msra.mxu0 0.0
    %1577 = vmatprep.subr.mxu0 0.0
    %1578 = vmatpush1.msra.mxu0 0.0
    %1579 = vmatprep.subr.mxu0 0.0
    %1580 = vmatpush1.msra.mxu0 0.0
    %1581 = vmatprep.subr.mxu0 0.0
    %1582 = vmatpush1.msra.mxu0 0.0
    %1583 = vmatprep.subr.mxu0 0.0
    %1584 = vmatpush1.msra.mxu0 0.0
    %1585 = vmatprep.subr.mxu0 0.0
    %1586 = vmatpush1.msra.mxu0 0.0
    %1587 = vmatprep.subr.mxu0 0.0
    %1588 = vmatpush1.msra.mxu0 0.0
    %1589 = vmatprep.subr.mxu0 0.0
    %1590 = vmatpush1.msra.mxu0 0.0
    %1591 = vmatprep.subr.mxu0 0.0
    %1592 = vmatpush1.msra.mxu0 0.0
    %1593 = vmatprep.subr.mxu0 0.0
    %1594 = vmatpush1.msra.mxu0 0.0
    %1595 = vmatprep.subr.mxu0 0.0
    %1596 = vmatpush1.msra.mxu0 0.0
    %1597 = vmatprep.subr.mxu0 0.0
    %1598 = vmatpush1.msra.mxu0 0.0
    %1599 = vmatprep.subr.mxu0 0.0
    %1600 = vmatpush1.msra.mxu0 0.0
    %1601 = vmatprep.subr.mxu0 %v1569
    %1602 = vmatpush1.msra.mxu0 %v1566
    %1603 = vmatprep.subr.mxu0 0.0
    %1604 = vmatpush2.msra.mxu0 0.0
    %1605 = vmatprep.subr.mxu0 0.0
    %1606 = vmatpush2.msra.mxu0 0.0
    %1607 = vmatprep.subr.mxu0 0.0
    %1608 = vmatpush2.msra.mxu0 0.0
    %1609 = vmatprep.subr.mxu0 0.0
    %1610 = vmatpush2.msra.mxu0 0.0
    %1611 = vmatprep.subr.mxu0 0.0
    %1612 = vmatpush2.msra.mxu0 0.0
    %1613 = vmatprep.subr.mxu0 0.0
    %1614 = vmatpush2.msra.mxu0 0.0
    %1615 = vmatprep.subr.mxu0 0.0
    %1616 = vmatpush2.msra.mxu0 0.0
    %1617 = vmatprep.subr.mxu0 0.0
    %1618 = vmatpush2.msra.mxu0 0.0
    %1619 = vmatprep.subr.mxu0 0.0
    %1620 = vmatpush2.msra.mxu0 0.0
    %1621 = vmatprep.subr.mxu0 0.0
    %1622 = vmatpush2.msra.mxu0 0.0
    %1623 = vmatprep.subr.mxu0 0.0
    %1624 = vmatpush2.msra.mxu0 0.0
    %1625 = vmatprep.subr.mxu0 0.0
    %1626 = vmatpush2.msra.mxu0 0.0
    %1627 = vmatprep.subr.mxu0 0.0
    %1628 = vmatpush2.msra.mxu0 0.0
    %1629 = vmatprep.subr.mxu0 0.0
    %1630 = vmatpush2.msra.mxu0 0.0
    %1631 = vmatprep.subr.mxu0 0.0
    %1632 = vmatpush2.msra.mxu0 0.0
    %1633 = vmatprep.subr.mxu0 0.0
    %1634 = vmatpush2.msra.mxu0 0.0
    %1635 = vmatprep.mubr.f32.mxu0 0.0
    %1636 = vmatmul.mubr.f32.gmra.mxu0 %v1563
    %v1637 = vpop.f32.mrf.mxu0
    %v1638 = vadd.f32 0.0, %v1637
    %v1639 = vpop.f32.mrf.mxu0
    %v1640 = vadd.f32 0.0, %v1639
    %1641 = vdwg.mxu0
    %v1643 = vsel %vm103, %v1560, 0
    %v1646 = vsel %vm103, %v1561, 0
    %1648 = vmatprep.subr.mxu0 0.0
    %1649 = vmatpush1.msra.mxu0 0.0
    %1650 = vmatprep.subr.mxu0 0.0
    %1651 = vmatpush1.msra.mxu0 0.0
    %1652 = vmatprep.subr.mxu0 0.0
    %1653 = vmatpush1.msra.mxu0 0.0
    %1654 = vmatprep.subr.mxu0 0.0
    %1655 = vmatpush1.msra.mxu0 0.0
    %1656 = vmatprep.subr.mxu0 0.0
    %1657 = vmatpush1.msra.mxu0 0.0
    %1658 = vmatprep.subr.mxu0 0.0
    %1659 = vmatpush1.msra.mxu0 0.0
    %1660 = vmatprep.subr.mxu0 0.0
    %1661 = vmatpush1.msra.mxu0 0.0
    %1662 = vmatprep.subr.mxu0 0.0
    %1663 = vmatpush1.msra.mxu0 0.0
    %1664 = vmatprep.subr.mxu0 0.0
    %1665 = vmatpush1.msra.mxu0 0.0
    %1666 = vmatprep.subr.mxu0 0.0
    %1667 = vmatpush1.msra.mxu0 0.0
    %1668 = vmatprep.subr.mxu0 0.0
    %1669 = vmatpush1.msra.mxu0 0.0
    %1670 = vmatprep.subr.mxu0 0.0
    %1671 = vmatpush1.msra.mxu0 0.0
    %1672 = vmatprep.subr.mxu0 0.0
    %1673 = vmatpush1.msra.mxu0 0.0
    %1674 = vmatprep.subr.mxu0 0.0
    %1675 = vmatpush1.msra.mxu0 0.0
    %1676 = vmatprep.subr.mxu0 0.0
    %1677 = vmatpush1.msra.mxu0 0.0
    %1678 = vmatprep.subr.mxu0 %v1646
    %1679 = vmatpush1.msra.mxu0 %v1643
    %1680 = vmatprep.subr.mxu0 0.0
    %1681 = vmatpush2.msra.mxu0 0.0
    %1682 = vmatprep.subr.mxu0 0.0
    %1683 = vmatpush2.msra.mxu0 0.0
    %1684 = vmatprep.subr.mxu0 0.0
    %1685 = vmatpush2.msra.mxu0 0.0
    %1686 = vmatprep.subr.mxu0 0.0
    %1687 = vmatpush2.msra.mxu0 0.0
    %1688 = vmatprep.subr.mxu0 0.0
    %1689 = vmatpush2.msra.mxu0 0.0
    %1690 = vmatprep.subr.mxu0 0.0
    %1691 = vmatpush2.msra.mxu0 0.0
    %1692 = vmatprep.subr.mxu0 0.0
    %1693 = vmatpush2.msra.mxu0 0.0
    %1694 = vmatprep.subr.mxu0 0.0
    %1695 = vmatpush2.msra.mxu0 0.0
    %1696 = vmatprep.subr.mxu0 0.0
    %1697 = vmatpush2.msra.mxu0 0.0
    %1698 = vmatprep.subr.mxu0 0.0
    %1699 = vmatpush2.msra.mxu0 0.0
    %1700 = vmatprep.subr.mxu0 0.0
    %1701 = vmatpush2.msra.mxu0 0.0
    %1702 = vmatprep.subr.mxu0 0.0
    %1703 = vmatpush2.msra.mxu0 0.0
    %1704 = vmatprep.subr.mxu0 0.0
    %1705 = vmatpush2.msra.mxu0 0.0
    %1706 = vmatprep.subr.mxu0 0.0
    %1707 = vmatpush2.msra.mxu0 0.0
    %1708 = vmatprep.subr.mxu0 0.0
    %1709 = vmatpush2.msra.mxu0 0.0
    %1710 = vmatprep.subr.mxu0 0.0
    %1711 = vmatpush2.msra.mxu0 0.0
    %1712 = vmatprep.mubr.f32.mxu0 0.0
    %1713 = vmatmul.mubr.f32.gmra.mxu0 %v1563
    %v1714 = vpop.f32.mrf.mxu0
    %v1715 = vadd.f32 0.0, %v1714
    %v1716 = vpop.f32.mrf.mxu0
    %v1717 = vadd.f32 0.0, %v1716
    %1718 = vdwg.mxu0
    %v1719 = vadd.f32 %v1530, %v1638
    %v1720 = vadd.f32 %v1531, %v1640
    %v1721 = vadd.f32 %v1532, %v1715
    %v1722 = vadd.f32 %v1533, %v1717
    %1723 = vst [vmem:[#allocation2] sm:$0xff] %v1719
    %1724 = vst [vmem:[#allocation2 + $0x8] sm:$0xff] %v1720
    %1725 = vst [vmem:[#allocation2 + $0x10] sm:$0xff] %v1721
    %1726 = vst [vmem:[#allocation2 + $0x18] sm:$0xff] %v1722
    // Predicated region
    $region14: #{tpu_custom_call.1} parent=1 // pred_check
      _
    $region15: #{tpu_custom_call.1} parent=1 // pred_check_branch
      %1728 = sbr.rel (0) target = $region17
    $region16: #{tpu_custom_call.1} parent=1 // pred_region
      %s1730 = ssub.s32 512, 512
      %1731 = vsyncadd [#allocation3], %s1730
      %s1732 = sshll.u32 [#allocation2], 4
      %s1733 = int_to_ptr.vmem [resolvable:$true] %s1732
      %1738 = dma.vmem_to_hbm [thread:$0]  %s1733, 512, %s3, [#allocation3], 256, 256, 16
    $region17: #{tpu_custom_call.1} parent=1 // pred_fallthru
      _
    // Predicated region
    $region18: #{tpu_custom_call.1} parent=1 // pred_check
      _
    $region19: #{tpu_custom_call.1} parent=1 // pred_check_branch
      %1740 = sbr.rel (0) target = $region21
    $region20: #{tpu_custom_call.1} parent=1 // pred_region
      %1741 = dma.done [#allocation3], 512
    $region21: #{tpu_custom_call.1} parent=1 // pred_fallthru
      _
    %1742 = vsyncpa [#allocation3], 1

</llo_original>
